<compile_context>
chip_gen: v7x
topology: tpu7x:2x2x1
jax: 0.10.0
libtpu: 0.0.40
codegen_flags: <defaults>
</compile_context>

<pallas_src>
import functools

import jax
import jax.numpy as jnp
from jax import lax
from jax.experimental import pallas as pl
from jax.experimental.pallas import tpu as pltpu

EPS = 1e-5


# ------------------------------ shared helpers -------------------------------

def _pointwise_matmul(w, h):
    """1x1 conv on a (Cin, TS) tile -> (Cout, TS).

    For tiny channel counts an (Cout x Cin) matmul uses <1% of the MXU and pays
    fill/drain latency on an HBM-bound kernel, so use Cin broadcast-FMAs on the
    VPU instead; keep the MXU path for realistic channel counts.
    """
    cout, cin = w.shape
    if cin >= 64 and cout >= 64:
        return jnp.dot(w, h, preferred_element_type=jnp.float32)
    y = w[:, 0:1] * h[0:1, :]
    for k in range(1, cin):
        y = y + w[:, k:k + 1] * h[k:k + 1, :]
    return y


# ----------------------------- Pallas kernels --------------------------------

def _depthwise_kernel(x_ref, w_ref, o_ref, s_ref, ss_ref, xp_ref, *,
                      K, dilation, stride, H, W, Ho, Wo, pad):
    """Dilated depthwise conv + BN1 partial statistics for one batch element.

    x_ref : (1, Cin, H*W)    flattened NCHW input
    w_ref : (Cin, K*K)       per-channel taps (single VMEM tile)
    o_ref : (1, Cin, Ho*Wo)  lane-dense depthwise output
    s_ref : (1, Cin, 1)      per-channel partial sum   (BN1 mean)
    ss_ref: (1, Cin, 1)      per-channel partial sumsq (BN1 var)
    xp_ref: (Cin, Hp*Wp)     flat zero-padded scratch (minimal padding)
    """
    Cin = x_ref.shape[1]
    Hp, Wp = H + 2 * pad, W + 2 * pad

    # ---- build the zero-padded image in the flat scratch -------------------
    # Only the halo is zero-filled (head block, 2*pad gap after each row, tail
    # block); the interior comes straight from the already-flat input rows.
    if pad:
        head = pad * Wp + pad
        xp_ref[:, pl.ds(0, head)] = jnp.zeros((Cin, head), jnp.float32)
        for r in range(H):
            q = head + r * Wp
            xp_ref[:, pl.ds(q, W)] = x_ref[0, :, pl.ds(r * W, W)]
            gap = head if r == H - 1 else 2 * pad        # tail after last row
            xp_ref[:, pl.ds(q + W, gap)] = jnp.zeros((Cin, gap), jnp.float32)
    else:
        xp_ref[...] = x_ref[0]

    # ---- tap accumulation in flattened, padded-pitch output coordinates ----
    # Output pixel (ho, wo) sits at g = ho*Wp + wo; tap (kh, kw) needs the flat
    # padded-image element stride*g + (kh*Wp + kw)*dilation, so every tap is one
    # contiguous (or strided) lane slice of the scratch and the per-channel
    # weight broadcasts as a (Cin, 1) column -- no per-tap relayout copies.
    Lg = (Ho - 1) * Wp + Wo
    acc = jnp.zeros((Cin, Lg), jnp.float32)
    for kh in range(K):
        for kw in range(K):
            shift = (kh * Wp + kw) * dilation
            if stride == 1:
                patch = xp_ref[:, pl.ds(shift, Lg)]
            else:
                span = (Lg - 1) * stride + 1
                patch = xp_ref[:, pl.ds(shift, span)][:, ::stride]
            acc = acc + w_ref[:, pl.ds(kh * K + kw, 1)] * patch

    # ---- compact padded-pitch rows into the lane-dense (Cin, Ho*Wo) output --
    for ho in range(Ho):
        o_ref[0, :, pl.ds(ho * Wo, Wo)] = (
            acc[:, ho * Wp:ho * Wp + Wo].astype(o_ref.dtype))

    # BN1 partial statistics from the packed tile (cheap VMEM re-read; avoids
    # masking the padded-pitch gap columns of `acc`).
    y = o_ref[0]
    s_ref[0] = jnp.sum(y, axis=1, keepdims=True)
    ss_ref[0] = jnp.sum(y * y, axis=1, keepdims=True)


def _pointwise_stats_kernel(x_ref, w_ref, scale1_ref, bias1_ref, s_ref, ss_ref):
    """BN1-affine + ReLU + 1x1 conv, emitting ONLY BN2 partial statistics.

    x_ref    : (1, Cin, TS)   depthwise-output tile (channel-major, lane-dense)
    w_ref    : (Cout, Cin)
    scale1/bias1 : (Cin, 1)   folded BN1 affine
    s_ref/ss_ref : (1, 1, Cout, 1) per-tile partial sum / sumsq of the 1x1 output
    """
    h = jnp.maximum(x_ref[0] * scale1_ref[...] + bias1_ref[...], 0.0)
    y = _pointwise_matmul(w_ref[...], h)
    s_ref[0, 0] = jnp.sum(y, axis=1, keepdims=True)
    ss_ref[0, 0] = jnp.sum(y * y, axis=1, keepdims=True)


def _pointwise_bn_relu_kernel(x_ref, w_ref, scale1_ref, bias1_ref,
                              scale2_ref, bias2_ref, o_ref):
    """Recompute BN1-affine+ReLU+1x1 conv and apply BN2-affine+ReLU in one pass
    (avoids writing + re-reading the pre-BN2 activation through HBM)."""
    h = jnp.maximum(x_ref[0] * scale1_ref[...] + bias1_ref[...], 0.0)
    y = _pointwise_matmul(w_ref[...], h)
    o_ref[0] = jnp.maximum(
        y * scale2_ref[...] + bias2_ref[...], 0.0).astype(o_ref.dtype)


# ------------------------------ host wrapper ---------------------------------

def _pick_spatial_tile(sp, cap=4096):
    """Return a legal, lane-dense spatial tile: the full extent if it fits the
    cap, else the largest 128-multiple divisor, else the full extent (always a
    legal block shape).  cap=4096 amortizes per-grid-step overhead on v5e/v6e;
    drop to <=2048 on v7x (64 MiB VMEM) for large channel counts."""
    if sp <= cap:
        return sp
    for t in range(cap - cap % 128, 127, -128):
        if sp % t == 0:
            return t
    # TODO(synk): for huge Sp with no 128-multiple divisor, pad Sp to a multiple
    # of 128 and mask the tail instead of taking the full extent as one block.
    return sp


def separable_aspp_conv(x_nchw, params, *, stride=1, padding=0, dilation=1):
    """Forward pass matching the PyTorch SeparableAsppConv module (training-mode BN)."""
    w_dw = params["w_dw"]          # (Cin, 1, K, K)  PyTorch depthwise layout
    w_pw = params["w_pw"]          # (Cout, Cin, 1, 1)
    g1, b1 = params["gamma1"], params["beta1"]   # (Cin,)
    g2, b2 = params["gamma2"], params["beta2"]   # (Cout,)

    N, Cin, H, W = x_nchw.shape
    K = w_dw.shape[-1]
    Cout = w_pw.shape[0]
    Ho = (H + 2 * padding - dilation * (K - 1) - 1) // stride + 1
    Wo = (W + 2 * padding - dilation * (K - 1) - 1) // stride + 1
    Sp = Ho * Wo
    Hp, Wp = H + 2 * padding, W + 2 * padding

    x_flat = x_nchw.astype(jnp.float32).reshape(N, Cin, H * W)   # free reshape
    w_taps = w_dw[:, 0, :, :].reshape(Cin, K * K).astype(jnp.float32)
    w_mat = w_pw[:, :, 0, 0].astype(jnp.float32)                 # (Cout, Cin)

    # ----- kernel 1: depthwise dilated conv (+BN1 stats), grid over batch -----
    # TODO(synk): for v7x / large images add a row-block grid axis with a
    # (K-1)*dilation halo so per-step VMEM stays under ~32 MiB and both
    # TensorCores get work even when N is small.
    dw_kernel = functools.partial(
        _depthwise_kernel, K=K, dilation=dilation, stride=stride,
        H=H, W=W, Ho=Ho, Wo=Wo, pad=padding)

    y_dw, ps1, pss1 = pl.pallas_call(
        dw_kernel,
        out_shape=(jax.ShapeDtypeStruct((N, Cin, Sp), jnp.float32),
                   jax.ShapeDtypeStruct((N, Cin, 1), jnp.float32),
                   jax.ShapeDtypeStruct((N, Cin, 1), jnp.float32)),
        grid=(N,),
        in_specs=[
            pl.BlockSpec((1, Cin, H * W), lambda n: (n, 0, 0)),
            pl.BlockSpec((Cin, K * K), lambda n: (0, 0)),
        ],
        out_specs=(
            pl.BlockSpec((1, Cin, Sp), lambda n: (n, 0, 0)),
            pl.BlockSpec((1, Cin, 1), lambda n: (n, 0, 0)),
            pl.BlockSpec((1, Cin, 1), lambda n: (n, 0, 0)),
        ),
        scratch_shapes=[pltpu.VMEM((Cin, Hp * Wp), jnp.float32)],
        compiler_params=pltpu.CompilerParams(dimension_semantics=("parallel",)),
    )(x_flat, w_taps)

    # ----- glue: fold tiny (Cin,) BN1 statistics into an affine -----
    # NOTE: E[x^2]-E[x]^2 in f32 is fine at these scales; use centered/Welford
    # partial sums if |mean| >> std in production.
    cnt = float(N * Sp)
    mean1 = jnp.sum(ps1, axis=(0, 2)) / cnt
    var1 = jnp.sum(pss1, axis=(0, 2)) / cnt - mean1 * mean1   # biased (train mode)
    s1 = g1 * lax.rsqrt(var1 + EPS)
    scale1 = s1[:, None]                      # (Cin, 1)
    bias1 = (b1 - mean1 * s1)[:, None]        # (Cin, 1)

    # ----- kernel 2: BN1-apply + ReLU + 1x1 conv -> BN2 partial stats only -----
    TS = _pick_spatial_tile(Sp)
    n_sp = Sp // TS

    ps2, pss2 = pl.pallas_call(
        _pointwise_stats_kernel,
        out_shape=(jax.ShapeDtypeStruct((N, n_sp, Cout, 1), jnp.float32),
                   jax.ShapeDtypeStruct((N, n_sp, Cout, 1), jnp.float32)),
        grid=(N, n_sp),
        in_specs=[
            pl.BlockSpec((1, Cin, TS), lambda n, s: (n, 0, s)),
            pl.BlockSpec((Cout, Cin), lambda n, s: (0, 0)),
            pl.BlockSpec((Cin, 1), lambda n, s: (0, 0)),
            pl.BlockSpec((Cin, 1), lambda n, s: (0, 0)),
        ],
        out_specs=(
            pl.BlockSpec((1, 1, Cout, 1), lambda n, s: (n, s, 0, 0)),
            pl.BlockSpec((1, 1, Cout, 1), lambda n, s: (n, s, 0, 0)),
        ),
        compiler_params=pltpu.CompilerParams(
            dimension_semantics=("parallel", "parallel")),
    )(y_dw, w_mat, scale1, bias1)

    # ----- glue: fold tiny (Cout,) BN2 statistics into an affine -----
    mean2 = jnp.sum(ps2, axis=(0, 1, 3)) / cnt
    var2 = jnp.sum(pss2, axis=(0, 1, 3)) / cnt - mean2 * mean2
    s2 = g2 * lax.rsqrt(var2 + EPS)
    scale2 = s2[:, None]                      # (Cout, 1)
    bias2 = (b2 - mean2 * s2)[:, None]        # (Cout, 1)

    # ----- kernel 3: recompute BN1+ReLU+1x1, apply BN2+ReLU, write NCHW-flat ---
    out_flat = pl.pallas_call(
        _pointwise_bn_relu_kernel,
        out_shape=jax.ShapeDtypeStruct((N, Cout, Sp), jnp.float32),
        grid=(N, n_sp),
        in_specs=[
            pl.BlockSpec((1, Cin, TS), lambda n, s: (n, 0, s)),
            pl.BlockSpec((Cout, Cin), lambda n, s: (0, 0)),
            pl.BlockSpec((Cin, 1), lambda n, s: (0, 0)),
            pl.BlockSpec((Cin, 1), lambda n, s: (0, 0)),
            pl.BlockSpec((Cout, 1), lambda n, s: (0, 0)),
            pl.BlockSpec((Cout, 1), lambda n, s: (0, 0)),
        ],
        out_specs=pl.BlockSpec((1, Cout, TS), lambda n, s: (n, 0, s)),
        compiler_params=pltpu.CompilerParams(
            dimension_semantics=("parallel", "parallel")),
    )(y_dw, w_mat, scale1, bias1, scale2, bias2)

    # already channel-major: just split the flattened spatial dim (free reshape)
    return out_flat.reshape(N, Cout, Ho, Wo)


# --------------------------- pure-JAX reference -------------------------------

def _reference(x, params, *, stride, padding, dilation):
    w_dw, w_pw = params["w_dw"], params["w_pw"]
    g1, b1, g2, b2 = (params["gamma1"], params["beta1"],
                      params["gamma2"], params["beta2"])
    Cin = x.shape[1]
    dn = lax.conv_dimension_numbers(x.shape, w_dw.shape, ("NCHW", "OIHW", "NCHW"))

    def bn_train(y, gamma, beta):
        mean = y.mean(axis=(0, 2, 3), keepdims=True)
        var = y.var(axis=(0, 2, 3), keepdims=True)
        return ((y - mean) / jnp.sqrt(var + EPS) * gamma[None, :, None, None]
                + beta[None, :, None, None])

    y = lax.conv_general_dilated(
        x, w_dw, window_strides=(stride, stride),
        padding=[(padding, padding), (padding, padding)],
        rhs_dilation=(dilation, dilation),
        dimension_numbers=dn, feature_group_count=Cin)
    y = jnp.maximum(bn_train(y, g1, b1), 0.0)
    dn2 = lax.conv_dimension_numbers(y.shape, w_pw.shape, ("NCHW", "OIHW", "NCHW"))
    y = lax.conv_general_dilated(y, w_pw, (1, 1), "VALID", dimension_numbers=dn2)
    y = jnp.maximum(bn_train(y, g2, b2), 0.0)
    return y


# ---------------------------------- main --------------------------------------

if __name__ == "__main__":
    in_channels, out_channels = 4, 8
    kernel_size, stride, padding, dilation = 3, 1, 2, 2  # typical ASPP branch

    key = jax.random.PRNGKey(0)
    k_x, k_dw, k_pw, k_g1, k_b1, k_g2, k_b2 = jax.random.split(key, 7)

    x = jax.random.normal(k_x, (2, in_channels, 16, 16), jnp.float32)
    params = {
        "w_dw": 0.2 * jax.random.normal(
            k_dw, (in_channels, 1, kernel_size, kernel_size), jnp.float32),
        "w_pw": 0.2 * jax.random.normal(
            k_pw, (out_channels, in_channels, 1, 1), jnp.float32),
        "gamma1": 1.0 + 0.1 * jax.random.normal(k_g1, (in_channels,), jnp.float32),
        "beta1": 0.1 * jax.random.normal(k_b1, (in_channels,), jnp.float32),
        "gamma2": 1.0 + 0.1 * jax.random.normal(k_g2, (out_channels,), jnp.float32),
        "beta2": 0.1 * jax.random.normal(k_b2, (out_channels,), jnp.float32),
    }

    out = separable_aspp_conv(x, params, stride=stride, padding=padding,
                              dilation=dilation)
    out = jax.block_until_ready(out)

    ref = jax.block_until_ready(
        _reference(x, params, stride=stride, padding=padding, dilation=dilation))

    assert out.shape == ref.shape, (out.shape, ref.shape)
    assert jnp.allclose(out, ref, atol=1e-4, rtol=1e-4), float(
        jnp.max(jnp.abs(out - ref)))
    print("KERNEL_OK")
</pallas_src>

<mosaic_0001>
module attributes {stable_mosaic.version = 11 : i64} {
  func.func @_depthwise_kernel(%arg0: i32, %arg1: memref<1x4x256xf32, #tpu.memory_space<vmem>>, %arg2: memref<4x9xf32, #tpu.memory_space<vmem>>, %arg3: memref<1x4x256xf32, #tpu.memory_space<vmem>>, %arg4: memref<1x4x1xf32, #tpu.memory_space<vmem>>, %arg5: memref<1x4x1xf32, #tpu.memory_space<vmem>>, %arg6: memref<4x400xf32, #tpu.memory_space<vmem>>) attributes {dimension_semantics = [#tpu.dimension_semantics<parallel>], iteration_bounds = array<i64: 2>, scalar_prefetch = 0 : i64, scratch_operands = 1 : i64, tpu.core_type = #tpu.core_type<tc>, window_params = [{transform_indices = @transform_0, window_bounds = array<i64: 1, 4, 256>}, {pipeline_mode = #tpu.pipeline_mode<synchronous>, transform_indices = @transform_1, window_bounds = array<i64: 4, 9>}, {transform_indices = @transform_2, window_bounds = array<i64: 1, 4, 256>}, {transform_indices = @transform_3, window_bounds = array<i64: 1, 4, 1>}, {transform_indices = @transform_4, window_bounds = array<i64: 1, 4, 1>}]} {
    %cst = arith.constant 0.000000e+00 : f32
    %0 = vector.broadcast %cst : f32 to vector<4x42xf32>
    %c0 = arith.constant 0 : index
    %c0_0 = arith.constant 0 : index
    %1 = vector.load %arg6[%c0, %c0_0] : memref<4x400xf32, #tpu.memory_space<vmem>>, vector<4x42xf32>
    tpu.vector_store %arg6[%c0, %c0_0], %0 {strides = array<i32>} : memref<4x400xf32, #tpu.memory_space<vmem>>, vector<4x42xf32>,
    %c0_1 = arith.constant 0 : index
    %c0_2 = arith.constant 0 : index
    %c0_3 = arith.constant 0 : index
    %2 = vector.load %arg1[%c0_1, %c0_2, %c0_3] : memref<1x4x256xf32, #tpu.memory_space<vmem>>, vector<1x4x16xf32>
    %3 = vector.shape_cast %2 : vector<1x4x16xf32> to vector<4x16xf32>
    %c0_4 = arith.constant 0 : index
    %c42 = arith.constant 42 : index
    %4 = vector.load %arg6[%c0_4, %c42] : memref<4x400xf32, #tpu.memory_space<vmem>>, vector<4x16xf32>
    tpu.vector_store %arg6[%c0_4, %c42], %3 {strides = array<i32>} : memref<4x400xf32, #tpu.memory_space<vmem>>, vector<4x16xf32>,
    %cst_5 = arith.constant 0.000000e+00 : f32
    %5 = vector.broadcast %cst_5 : f32 to vector<4x4xf32>
    %c0_6 = arith.constant 0 : index
    %c58 = arith.constant 58 : index
    %6 = vector.load %arg6[%c0_6, %c58] : memref<4x400xf32, #tpu.memory_space<vmem>>, vector<4x4xf32>
    tpu.vector_store %arg6[%c0_6, %c58], %5 {strides = array<i32>} : memref<4x400xf32, #tpu.memory_space<vmem>>, vector<4x4xf32>,
    %c0_7 = arith.constant 0 : index
    %c0_8 = arith.constant 0 : index
    %c16 = arith.constant 16 : index
    %7 = vector.load %arg1[%c0_7, %c0_8, %c16] : memref<1x4x256xf32, #tpu.memory_space<vmem>>, vector<1x4x16xf32>
    %8 = vector.shape_cast %7 : vector<1x4x16xf32> to vector<4x16xf32>
    %c0_9 = arith.constant 0 : index
    %c62 = arith.constant 62 : index
    %9 = vector.load %arg6[%c0_9, %c62] : memref<4x400xf32, #tpu.memory_space<vmem>>, vector<4x16xf32>
    tpu.vector_store %arg6[%c0_9, %c62], %8 {strides = array<i32>} : memref<4x400xf32, #tpu.memory_space<vmem>>, vector<4x16xf32>,
    %cst_10 = arith.constant 0.000000e+00 : f32
    %10 = vector.broadcast %cst_10 : f32 to vector<4x4xf32>
    %c0_11 = arith.constant 0 : index
    %c78 = arith.constant 78 : index
    %11 = vector.load %arg6[%c0_11, %c78] : memref<4x400xf32, #tpu.memory_space<vmem>>, vector<4x4xf32>
    tpu.vector_store %arg6[%c0_11, %c78], %10 {strides = array<i32>} : memref<4x400xf32, #tpu.memory_space<vmem>>, vector<4x4xf32>,
    %c0_12 = arith.constant 0 : index
    %c0_13 = arith.constant 0 : index
    %c32 = arith.constant 32 : index
    %12 = vector.load %arg1[%c0_12, %c0_13, %c32] : memref<1x4x256xf32, #tpu.memory_space<vmem>>, vector<1x4x16xf32>
    %13 = vector.shape_cast %12 : vector<1x4x16xf32> to vector<4x16xf32>
    %c0_14 = arith.constant 0 : index
    %c82 = arith.constant 82 : index
    %14 = vector.load %arg6[%c0_14, %c82] : memref<4x400xf32, #tpu.memory_space<vmem>>, vector<4x16xf32>
    tpu.vector_store %arg6[%c0_14, %c82], %13 {strides = array<i32>} : memref<4x400xf32, #tpu.memory_space<vmem>>, vector<4x16xf32>,
    %cst_15 = arith.constant 0.000000e+00 : f32
    %15 = vector.broadcast %cst_15 : f32 to vector<4x4xf32>
    %c0_16 = arith.constant 0 : index
    %c98 = arith.constant 98 : index
    %16 = vector.load %arg6[%c0_16, %c98] : memref<4x400xf32, #tpu.memory_space<vmem>>, vector<4x4xf32>
    tpu.vector_store %arg6[%c0_16, %c98], %15 {strides = array<i32>} : memref<4x400xf32, #tpu.memory_space<vmem>>, vector<4x4xf32>,
    %c0_17 = arith.constant 0 : index
    %c0_18 = arith.constant 0 : index
    %c48 = arith.constant 48 : index
    %17 = vector.load %arg1[%c0_17, %c0_18, %c48] : memref<1x4x256xf32, #tpu.memory_space<vmem>>, vector<1x4x16xf32>
    %18 = vector.shape_cast %17 : vector<1x4x16xf32> to vector<4x16xf32>
    %c0_19 = arith.constant 0 : index
    %c102 = arith.constant 102 : index
    %19 = vector.load %arg6[%c0_19, %c102] : memref<4x400xf32, #tpu.memory_space<vmem>>, vector<4x16xf32>
    tpu.vector_store %arg6[%c0_19, %c102], %18 {strides = array<i32>} : memref<4x400xf32, #tpu.memory_space<vmem>>, vector<4x16xf32>,
    %cst_20 = arith.constant 0.000000e+00 : f32
    %20 = vector.broadcast %cst_20 : f32 to vector<4x4xf32>
    %c0_21 = arith.constant 0 : index
    %c118 = arith.constant 118 : index
    %21 = vector.load %arg6[%c0_21, %c118] : memref<4x400xf32, #tpu.memory_space<vmem>>, vector<4x4xf32>
    tpu.vector_store %arg6[%c0_21, %c118], %20 {strides = array<i32>} : memref<4x400xf32, #tpu.memory_space<vmem>>, vector<4x4xf32>,
    %c0_22 = arith.constant 0 : index
    %c0_23 = arith.constant 0 : index
    %c64 = arith.constant 64 : index
    %22 = vector.load %arg1[%c0_22, %c0_23, %c64] : memref<1x4x256xf32, #tpu.memory_space<vmem>>, vector<1x4x16xf32>
    %23 = vector.shape_cast %22 : vector<1x4x16xf32> to vector<4x16xf32>
    %c0_24 = arith.constant 0 : index
    %c122 = arith.constant 122 : index
    %24 = vector.load %arg6[%c0_24, %c122] : memref<4x400xf32, #tpu.memory_space<vmem>>, vector<4x16xf32>
    tpu.vector_store %arg6[%c0_24, %c122], %23 {strides = array<i32>} : memref<4x400xf32, #tpu.memory_space<vmem>>, vector<4x16xf32>,
    %cst_25 = arith.constant 0.000000e+00 : f32
    %25 = vector.broadcast %cst_25 : f32 to vector<4x4xf32>
    %c0_26 = arith.constant 0 : index
    %c138 = arith.constant 138 : index
    %26 = vector.load %arg6[%c0_26, %c138] : memref<4x400xf32, #tpu.memory_space<vmem>>, vector<4x4xf32>
    tpu.vector_store %arg6[%c0_26, %c138], %25 {strides = array<i32>} : memref<4x400xf32, #tpu.memory_space<vmem>>, vector<4x4xf32>,
    %c0_27 = arith.constant 0 : index
    %c0_28 = arith.constant 0 : index
    %c80 = arith.constant 80 : index
    %27 = vector.load %arg1[%c0_27, %c0_28, %c80] : memref<1x4x256xf32, #tpu.memory_space<vmem>>, vector<1x4x16xf32>
    %28 = vector.shape_cast %27 : vector<1x4x16xf32> to vector<4x16xf32>
    %c0_29 = arith.constant 0 : index
    %c142 = arith.constant 142 : index
    %29 = vector.load %arg6[%c0_29, %c142] : memref<4x400xf32, #tpu.memory_space<vmem>>, vector<4x16xf32>
    tpu.vector_store %arg6[%c0_29, %c142], %28 {strides = array<i32>} : memref<4x400xf32, #tpu.memory_space<vmem>>, vector<4x16xf32>,
    %cst_30 = arith.constant 0.000000e+00 : f32
    %30 = vector.broadcast %cst_30 : f32 to vector<4x4xf32>
    %c0_31 = arith.constant 0 : index
    %c158 = arith.constant 158 : index
    %31 = vector.load %arg6[%c0_31, %c158] : memref<4x400xf32, #tpu.memory_space<vmem>>, vector<4x4xf32>
    tpu.vector_store %arg6[%c0_31, %c158], %30 {strides = array<i32>} : memref<4x400xf32, #tpu.memory_space<vmem>>, vector<4x4xf32>,
    %c0_32 = arith.constant 0 : index
    %c0_33 = arith.constant 0 : index
    %c96 = arith.constant 96 : index
    %32 = vector.load %arg1[%c0_32, %c0_33, %c96] : memref<1x4x256xf32, #tpu.memory_space<vmem>>, vector<1x4x16xf32>
    %33 = vector.shape_cast %32 : vector<1x4x16xf32> to vector<4x16xf32>
    %c0_34 = arith.constant 0 : index
    %c162 = arith.constant 162 : index
    %34 = vector.load %arg6[%c0_34, %c162] : memref<4x400xf32, #tpu.memory_space<vmem>>, vector<4x16xf32>
    tpu.vector_store %arg6[%c0_34, %c162], %33 {strides = array<i32>} : memref<4x400xf32, #tpu.memory_space<vmem>>, vector<4x16xf32>,
    %cst_35 = arith.constant 0.000000e+00 : f32
    %35 = vector.broadcast %cst_35 : f32 to vector<4x4xf32>
    %c0_36 = arith.constant 0 : index
    %c178 = arith.constant 178 : index
    %36 = vector.load %arg6[%c0_36, %c178] : memref<4x400xf32, #tpu.memory_space<vmem>>, vector<4x4xf32>
    tpu.vector_store %arg6[%c0_36, %c178], %35 {strides = array<i32>} : memref<4x400xf32, #tpu.memory_space<vmem>>, vector<4x4xf32>,
    %c0_37 = arith.constant 0 : index
    %c0_38 = arith.constant 0 : index
    %c112 = arith.constant 112 : index
    %37 = vector.load %arg1[%c0_37, %c0_38, %c112] : memref<1x4x256xf32, #tpu.memory_space<vmem>>, vector<1x4x16xf32>
    %38 = vector.shape_cast %37 : vector<1x4x16xf32> to vector<4x16xf32>
    %c0_39 = arith.constant 0 : index
    %c182 = arith.constant 182 : index
    %39 = vector.load %arg6[%c0_39, %c182] : memref<4x400xf32, #tpu.memory_space<vmem>>, vector<4x16xf32>
    tpu.vector_store %arg6[%c0_39, %c182], %38 {strides = array<i32>} : memref<4x400xf32, #tpu.memory_space<vmem>>, vector<4x16xf32>,
    %cst_40 = arith.constant 0.000000e+00 : f32
    %40 = vector.broadcast %cst_40 : f32 to vector<4x4xf32>
    %c0_41 = arith.constant 0 : index
    %c198 = arith.constant 198 : index
    %41 = vector.load %arg6[%c0_41, %c198] : memref<4x400xf32, #tpu.memory_space<vmem>>, vector<4x4xf32>
    tpu.vector_store %arg6[%c0_41, %c198], %40 {strides = array<i32>} : memref<4x400xf32, #tpu.memory_space<vmem>>, vector<4x4xf32>,
    %c0_42 = arith.constant 0 : index
    %c0_43 = arith.constant 0 : index
    %c128 = arith.constant 128 : index
    %42 = vector.load %arg1[%c0_42, %c0_43, %c128] : memref<1x4x256xf32, #tpu.memory_space<vmem>>, vector<1x4x16xf32>
    %43 = vector.shape_cast %42 : vector<1x4x16xf32> to vector<4x16xf32>
    %c0_44 = arith.constant 0 : index
    %c202 = arith.constant 202 : index
    %44 = vector.load %arg6[%c0_44, %c202] : memref<4x400xf32, #tpu.memory_space<vmem>>, vector<4x16xf32>
    tpu.vector_store %arg6[%c0_44, %c202], %43 {strides = array<i32>} : memref<4x400xf32, #tpu.memory_space<vmem>>, vector<4x16xf32>,
    %cst_45 = arith.constant 0.000000e+00 : f32
    %45 = vector.broadcast %cst_45 : f32 to vector<4x4xf32>
    %c0_46 = arith.constant 0 : index
    %c218 = arith.constant 218 : index
    %46 = vector.load %arg6[%c0_46, %c218] : memref<4x400xf32, #tpu.memory_space<vmem>>, vector<4x4xf32>
    tpu.vector_store %arg6[%c0_46, %c218], %45 {strides = array<i32>} : memref<4x400xf32, #tpu.memory_space<vmem>>, vector<4x4xf32>,
    %c0_47 = arith.constant 0 : index
    %c0_48 = arith.constant 0 : index
    %c144 = arith.constant 144 : index
    %47 = vector.load %arg1[%c0_47, %c0_48, %c144] : memref<1x4x256xf32, #tpu.memory_space<vmem>>, vector<1x4x16xf32>
    %48 = vector.shape_cast %47 : vector<1x4x16xf32> to vector<4x16xf32>
    %c0_49 = arith.constant 0 : index
    %c222 = arith.constant 222 : index
    %49 = vector.load %arg6[%c0_49, %c222] : memref<4x400xf32, #tpu.memory_space<vmem>>, vector<4x16xf32>
    tpu.vector_store %arg6[%c0_49, %c222], %48 {strides = array<i32>} : memref<4x400xf32, #tpu.memory_space<vmem>>, vector<4x16xf32>,
    %cst_50 = arith.constant 0.000000e+00 : f32
    %50 = vector.broadcast %cst_50 : f32 to vector<4x4xf32>
    %c0_51 = arith.constant 0 : index
    %c238 = arith.constant 238 : index
    %51 = vector.load %arg6[%c0_51, %c238] : memref<4x400xf32, #tpu.memory_space<vmem>>, vector<4x4xf32>
    tpu.vector_store %arg6[%c0_51, %c238], %50 {strides = array<i32>} : memref<4x400xf32, #tpu.memory_space<vmem>>, vector<4x4xf32>,
    %c0_52 = arith.constant 0 : index
    %c0_53 = arith.constant 0 : index
    %c160 = arith.constant 160 : index
    %52 = vector.load %arg1[%c0_52, %c0_53, %c160] : memref<1x4x256xf32, #tpu.memory_space<vmem>>, vector<1x4x16xf32>
    %53 = vector.shape_cast %52 : vector<1x4x16xf32> to vector<4x16xf32>
    %c0_54 = arith.constant 0 : index
    %c242 = arith.constant 242 : index
    %54 = vector.load %arg6[%c0_54, %c242] : memref<4x400xf32, #tpu.memory_space<vmem>>, vector<4x16xf32>
    tpu.vector_store %arg6[%c0_54, %c242], %53 {strides = array<i32>} : memref<4x400xf32, #tpu.memory_space<vmem>>, vector<4x16xf32>,
    %cst_55 = arith.constant 0.000000e+00 : f32
    %55 = vector.broadcast %cst_55 : f32 to vector<4x4xf32>
    %c0_56 = arith.constant 0 : index
    %c258 = arith.constant 258 : index
    %56 = vector.load %arg6[%c0_56, %c258] : memref<4x400xf32, #tpu.memory_space<vmem>>, vector<4x4xf32>
    tpu.vector_store %arg6[%c0_56, %c258], %55 {strides = array<i32>} : memref<4x400xf32, #tpu.memory_space<vmem>>, vector<4x4xf32>,
    %c0_57 = arith.constant 0 : index
    %c0_58 = arith.constant 0 : index
    %c176 = arith.constant 176 : index
    %57 = vector.load %arg1[%c0_57, %c0_58, %c176] : memref<1x4x256xf32, #tpu.memory_space<vmem>>, vector<1x4x16xf32>
    %58 = vector.shape_cast %57 : vector<1x4x16xf32> to vector<4x16xf32>
    %c0_59 = arith.constant 0 : index
    %c262 = arith.constant 262 : index
    %59 = vector.load %arg6[%c0_59, %c262] : memref<4x400xf32, #tpu.memory_space<vmem>>, vector<4x16xf32>
    tpu.vector_store %arg6[%c0_59, %c262], %58 {strides = array<i32>} : memref<4x400xf32, #tpu.memory_space<vmem>>, vector<4x16xf32>,
    %cst_60 = arith.constant 0.000000e+00 : f32
    %60 = vector.broadcast %cst_60 : f32 to vector<4x4xf32>
    %c0_61 = arith.constant 0 : index
    %c278 = arith.constant 278 : index
    %61 = vector.load %arg6[%c0_61, %c278] : memref<4x400xf32, #tpu.memory_space<vmem>>, vector<4x4xf32>
    tpu.vector_store %arg6[%c0_61, %c278], %60 {strides = array<i32>} : memref<4x400xf32, #tpu.memory_space<vmem>>, vector<4x4xf32>,
    %c0_62 = arith.constant 0 : index
    %c0_63 = arith.constant 0 : index
    %c192 = arith.constant 192 : index
    %62 = vector.load %arg1[%c0_62, %c0_63, %c192] : memref<1x4x256xf32, #tpu.memory_space<vmem>>, vector<1x4x16xf32>
    %63 = vector.shape_cast %62 : vector<1x4x16xf32> to vector<4x16xf32>
    %c0_64 = arith.constant 0 : index
    %c282 = arith.constant 282 : index
    %64 = vector.load %arg6[%c0_64, %c282] : memref<4x400xf32, #tpu.memory_space<vmem>>, vector<4x16xf32>
    tpu.vector_store %arg6[%c0_64, %c282], %63 {strides = array<i32>} : memref<4x400xf32, #tpu.memory_space<vmem>>, vector<4x16xf32>,
    %cst_65 = arith.constant 0.000000e+00 : f32
    %65 = vector.broadcast %cst_65 : f32 to vector<4x4xf32>
    %c0_66 = arith.constant 0 : index
    %c298 = arith.constant 298 : index
    %66 = vector.load %arg6[%c0_66, %c298] : memref<4x400xf32, #tpu.memory_space<vmem>>, vector<4x4xf32>
    tpu.vector_store %arg6[%c0_66, %c298], %65 {strides = array<i32>} : memref<4x400xf32, #tpu.memory_space<vmem>>, vector<4x4xf32>,
    %c0_67 = arith.constant 0 : index
    %c0_68 = arith.constant 0 : index
    %c208 = arith.constant 208 : index
    %67 = vector.load %arg1[%c0_67, %c0_68, %c208] : memref<1x4x256xf32, #tpu.memory_space<vmem>>, vector<1x4x16xf32>
    %68 = vector.shape_cast %67 : vector<1x4x16xf32> to vector<4x16xf32>
    %c0_69 = arith.constant 0 : index
    %c302 = arith.constant 302 : index
    %69 = vector.load %arg6[%c0_69, %c302] : memref<4x400xf32, #tpu.memory_space<vmem>>, vector<4x16xf32>
    tpu.vector_store %arg6[%c0_69, %c302], %68 {strides = array<i32>} : memref<4x400xf32, #tpu.memory_space<vmem>>, vector<4x16xf32>,
    %cst_70 = arith.constant 0.000000e+00 : f32
    %70 = vector.broadcast %cst_70 : f32 to vector<4x4xf32>
    %c0_71 = arith.constant 0 : index
    %c318 = arith.constant 318 : index
    %71 = vector.load %arg6[%c0_71, %c318] : memref<4x400xf32, #tpu.memory_space<vmem>>, vector<4x4xf32>
    tpu.vector_store %arg6[%c0_71, %c318], %70 {strides = array<i32>} : memref<4x400xf32, #tpu.memory_space<vmem>>, vector<4x4xf32>,
    %c0_72 = arith.constant 0 : index
    %c0_73 = arith.constant 0 : index
    %c224 = arith.constant 224 : index
    %72 = vector.load %arg1[%c0_72, %c0_73, %c224] : memref<1x4x256xf32, #tpu.memory_space<vmem>>, vector<1x4x16xf32>
    %73 = vector.shape_cast %72 : vector<1x4x16xf32> to vector<4x16xf32>
    %c0_74 = arith.constant 0 : index
    %c322 = arith.constant 322 : index
    %74 = vector.load %arg6[%c0_74, %c322] : memref<4x400xf32, #tpu.memory_space<vmem>>, vector<4x16xf32>
    tpu.vector_store %arg6[%c0_74, %c322], %73 {strides = array<i32>} : memref<4x400xf32, #tpu.memory_space<vmem>>, vector<4x16xf32>,
    %cst_75 = arith.constant 0.000000e+00 : f32
    %75 = vector.broadcast %cst_75 : f32 to vector<4x4xf32>
    %c0_76 = arith.constant 0 : index
    %c338 = arith.constant 338 : index
    %76 = vector.load %arg6[%c0_76, %c338] : memref<4x400xf32, #tpu.memory_space<vmem>>, vector<4x4xf32>
    tpu.vector_store %arg6[%c0_76, %c338], %75 {strides = array<i32>} : memref<4x400xf32, #tpu.memory_space<vmem>>, vector<4x4xf32>,
    %c0_77 = arith.constant 0 : index
    %c0_78 = arith.constant 0 : index
    %c240 = arith.constant 240 : index
    %77 = vector.load %arg1[%c0_77, %c0_78, %c240] : memref<1x4x256xf32, #tpu.memory_space<vmem>>, vector<1x4x16xf32>
    %78 = vector.shape_cast %77 : vector<1x4x16xf32> to vector<4x16xf32>
    %c0_79 = arith.constant 0 : index
    %c342 = arith.constant 342 : index
    %79 = vector.load %arg6[%c0_79, %c342] : memref<4x400xf32, #tpu.memory_space<vmem>>, vector<4x16xf32>
    tpu.vector_store %arg6[%c0_79, %c342], %78 {strides = array<i32>} : memref<4x400xf32, #tpu.memory_space<vmem>>, vector<4x16xf32>,
    %cst_80 = arith.constant 0.000000e+00 : f32
    %80 = vector.broadcast %cst_80 : f32 to vector<4x42xf32>
    %c0_81 = arith.constant 0 : index
    %c358 = arith.constant 358 : index
    %81 = vector.load %arg6[%c0_81, %c358] : memref<4x400xf32, #tpu.memory_space<vmem>>, vector<4x42xf32>
    tpu.vector_store %arg6[%c0_81, %c358], %80 {strides = array<i32>} : memref<4x400xf32, #tpu.memory_space<vmem>>, vector<4x42xf32>,
    %cst_82 = arith.constant 0.000000e+00 : f32
    %82 = vector.broadcast %cst_82 : f32 to vector<4x316xf32>
    %c0_83 = arith.constant 0 : index
    %c0_84 = arith.constant 0 : index
    %83 = vector.load %arg6[%c0_83, %c0_84] : memref<4x400xf32, #tpu.memory_space<vmem>>, vector<4x316xf32>
    %c0_85 = arith.constant 0 : index
    %c0_86 = arith.constant 0 : index
    %84 = vector.load %arg2[%c0_85, %c0_86] : memref<4x9xf32, #tpu.memory_space<vmem>>, vector<4x1xf32>
    %85 = vector.broadcast %84 : vector<4x1xf32> to vector<4x316xf32>
    %86 = arith.mulf %85, %83 : vector<4x316xf32>
    %87 = arith.addf %82, %86 : vector<4x316xf32>
    %c0_87 = arith.constant 0 : index
    %c2 = arith.constant 2 : index
    %88 = vector.load %arg6[%c0_87, %c2] : memref<4x400xf32, #tpu.memory_space<vmem>>, vector<4x316xf32>
    %c0_88 = arith.constant 0 : index
    %c1 = arith.constant 1 : index
    %89 = vector.load %arg2[%c0_88, %c1] : memref<4x9xf32, #tpu.memory_space<vmem>>, vector<4x1xf32>
    %90 = vector.broadcast %89 : vector<4x1xf32> to vector<4x316xf32>
    %91 = arith.mulf %90, %88 : vector<4x316xf32>
    %92 = arith.addf %87, %91 : vector<4x316xf32>
    %c0_89 = arith.constant 0 : index
    %c4 = arith.constant 4 : index
    %93 = vector.load %arg6[%c0_89, %c4] : memref<4x400xf32, #tpu.memory_space<vmem>>, vector<4x316xf32>
    %c0_90 = arith.constant 0 : index
    %c2_91 = arith.constant 2 : index
    %94 = vector.load %arg2[%c0_90, %c2_91] : memref<4x9xf32, #tpu.memory_space<vmem>>, vector<4x1xf32>
    %95 = vector.broadcast %94 : vector<4x1xf32> to vector<4x316xf32>
    %96 = arith.mulf %95, %93 : vector<4x316xf32>
    %97 = arith.addf %92, %96 : vector<4x316xf32>
    %c0_92 = arith.constant 0 : index
    %c40 = arith.constant 40 : index
    %98 = vector.load %arg6[%c0_92, %c40] : memref<4x400xf32, #tpu.memory_space<vmem>>, vector<4x316xf32>
    %c0_93 = arith.constant 0 : index
    %c3 = arith.constant 3 : index
    %99 = vector.load %arg2[%c0_93, %c3] : memref<4x9xf32, #tpu.memory_space<vmem>>, vector<4x1xf32>
    %100 = vector.broadcast %99 : vector<4x1xf32> to vector<4x316xf32>
    %101 = arith.mulf %100, %98 : vector<4x316xf32>
    %102 = arith.addf %97, %101 : vector<4x316xf32>
    %c0_94 = arith.constant 0 : index
    %c42_95 = arith.constant 42 : index
    %103 = vector.load %arg6[%c0_94, %c42_95] : memref<4x400xf32, #tpu.memory_space<vmem>>, vector<4x316xf32>
    %c0_96 = arith.constant 0 : index
    %c4_97 = arith.constant 4 : index
    %104 = vector.load %arg2[%c0_96, %c4_97] : memref<4x9xf32, #tpu.memory_space<vmem>>, vector<4x1xf32>
    %105 = vector.broadcast %104 : vector<4x1xf32> to vector<4x316xf32>
    %106 = arith.mulf %105, %103 : vector<4x316xf32>
    %107 = arith.addf %102, %106 : vector<4x316xf32>
    %c0_98 = arith.constant 0 : index
    %c44 = arith.constant 44 : index
    %108 = vector.load %arg6[%c0_98, %c44] : memref<4x400xf32, #tpu.memory_space<vmem>>, vector<4x316xf32>
    %c0_99 = arith.constant 0 : index
    %c5 = arith.constant 5 : index
    %109 = vector.load %arg2[%c0_99, %c5] : memref<4x9xf32, #tpu.memory_space<vmem>>, vector<4x1xf32>
    %110 = vector.broadcast %109 : vector<4x1xf32> to vector<4x316xf32>
    %111 = arith.mulf %110, %108 : vector<4x316xf32>
    %112 = arith.addf %107, %111 : vector<4x316xf32>
    %c0_100 = arith.constant 0 : index
    %c80_101 = arith.constant 80 : index
    %113 = vector.load %arg6[%c0_100, %c80_101] : memref<4x400xf32, #tpu.memory_space<vmem>>, vector<4x316xf32>
    %c0_102 = arith.constant 0 : index
    %c6 = arith.constant 6 : index
    %114 = vector.load %arg2[%c0_102, %c6] : memref<4x9xf32, #tpu.memory_space<vmem>>, vector<4x1xf32>
    %115 = vector.broadcast %114 : vector<4x1xf32> to vector<4x316xf32>
    %116 = arith.mulf %115, %113 : vector<4x316xf32>
    %117 = arith.addf %112, %116 : vector<4x316xf32>
    %c0_103 = arith.constant 0 : index
    %c82_104 = arith.constant 82 : index
    %118 = vector.load %arg6[%c0_103, %c82_104] : memref<4x400xf32, #tpu.memory_space<vmem>>, vector<4x316xf32>
    %c0_105 = arith.constant 0 : index
    %c7 = arith.constant 7 : index
    %119 = vector.load %arg2[%c0_105, %c7] : memref<4x9xf32, #tpu.memory_space<vmem>>, vector<4x1xf32>
    %120 = vector.broadcast %119 : vector<4x1xf32> to vector<4x316xf32>
    %121 = arith.mulf %120, %118 : vector<4x316xf32>
    %122 = arith.addf %117, %121 : vector<4x316xf32>
    %c0_106 = arith.constant 0 : index
    %c84 = arith.constant 84 : index
    %123 = vector.load %arg6[%c0_106, %c84] : memref<4x400xf32, #tpu.memory_space<vmem>>, vector<4x316xf32>
    %c0_107 = arith.constant 0 : index
    %c8 = arith.constant 8 : index
    %124 = vector.load %arg2[%c0_107, %c8] : memref<4x9xf32, #tpu.memory_space<vmem>>, vector<4x1xf32>
    %125 = vector.broadcast %124 : vector<4x1xf32> to vector<4x316xf32>
    %126 = arith.mulf %125, %123 : vector<4x316xf32>
    %127 = arith.addf %122, %126 : vector<4x316xf32>
    %128 = vector.extract_strided_slice %127 {offsets = [0, 0], sizes = [4, 16], strides = [1, 1]} : vector<4x316xf32> to vector<4x16xf32>
    %c0_108 = arith.constant 0 : index
    %c0_109 = arith.constant 0 : index
    %c0_110 = arith.constant 0 : index
    %129 = vector.load %arg3[%c0_108, %c0_109, %c0_110] : memref<1x4x256xf32, #tpu.memory_space<vmem>>, vector<1x4x16xf32>
    %130 = vector.shape_cast %129 : vector<1x4x16xf32> to vector<4x16xf32>
    %131 = vector.shape_cast %128 : vector<4x16xf32> to vector<1x4x16xf32>
    tpu.vector_store %arg3[%c0_108, %c0_109, %c0_110], %131 {strides = array<i32>} : memref<1x4x256xf32, #tpu.memory_space<vmem>>, vector<1x4x16xf32>,
    %132 = vector.extract_strided_slice %127 {offsets = [0, 20], sizes = [4, 16], strides = [1, 1]} : vector<4x316xf32> to vector<4x16xf32>
    %c0_111 = arith.constant 0 : index
    %c0_112 = arith.constant 0 : index
    %c16_113 = arith.constant 16 : index
    %133 = vector.load %arg3[%c0_111, %c0_112, %c16_113] : memref<1x4x256xf32, #tpu.memory_space<vmem>>, vector<1x4x16xf32>
    %134 = vector.shape_cast %133 : vector<1x4x16xf32> to vector<4x16xf32>
    %135 = vector.shape_cast %132 : vector<4x16xf32> to vector<1x4x16xf32>
    tpu.vector_store %arg3[%c0_111, %c0_112, %c16_113], %135 {strides = array<i32>} : memref<1x4x256xf32, #tpu.memory_space<vmem>>, vector<1x4x16xf32>,
    %136 = vector.extract_strided_slice %127 {offsets = [0, 40], sizes = [4, 16], strides = [1, 1]} : vector<4x316xf32> to vector<4x16xf32>
    %c0_114 = arith.constant 0 : index
    %c0_115 = arith.constant 0 : index
    %c32_116 = arith.constant 32 : index
    %137 = vector.load %arg3[%c0_114, %c0_115, %c32_116] : memref<1x4x256xf32, #tpu.memory_space<vmem>>, vector<1x4x16xf32>
    %138 = vector.shape_cast %137 : vector<1x4x16xf32> to vector<4x16xf32>
    %139 = vector.shape_cast %136 : vector<4x16xf32> to vector<1x4x16xf32>
    tpu.vector_store %arg3[%c0_114, %c0_115, %c32_116], %139 {strides = array<i32>} : memref<1x4x256xf32, #tpu.memory_space<vmem>>, vector<1x4x16xf32>,
    %140 = vector.extract_strided_slice %127 {offsets = [0, 60], sizes = [4, 16], strides = [1, 1]} : vector<4x316xf32> to vector<4x16xf32>
    %c0_117 = arith.constant 0 : index
    %c0_118 = arith.constant 0 : index
    %c48_119 = arith.constant 48 : index
    %141 = vector.load %arg3[%c0_117, %c0_118, %c48_119] : memref<1x4x256xf32, #tpu.memory_space<vmem>>, vector<1x4x16xf32>
    %142 = vector.shape_cast %141 : vector<1x4x16xf32> to vector<4x16xf32>
    %143 = vector.shape_cast %140 : vector<4x16xf32> to vector<1x4x16xf32>
    tpu.vector_store %arg3[%c0_117, %c0_118, %c48_119], %143 {strides = array<i32>} : memref<1x4x256xf32, #tpu.memory_space<vmem>>, vector<1x4x16xf32>,
    %144 = vector.extract_strided_slice %127 {offsets = [0, 80], sizes = [4, 16], strides = [1, 1]} : vector<4x316xf32> to vector<4x16xf32>
    %c0_120 = arith.constant 0 : index
    %c0_121 = arith.constant 0 : index
    %c64_122 = arith.constant 64 : index
    %145 = vector.load %arg3[%c0_120, %c0_121, %c64_122] : memref<1x4x256xf32, #tpu.memory_space<vmem>>, vector<1x4x16xf32>
    %146 = vector.shape_cast %145 : vector<1x4x16xf32> to vector<4x16xf32>
    %147 = vector.shape_cast %144 : vector<4x16xf32> to vector<1x4x16xf32>
    tpu.vector_store %arg3[%c0_120, %c0_121, %c64_122], %147 {strides = array<i32>} : memref<1x4x256xf32, #tpu.memory_space<vmem>>, vector<1x4x16xf32>,
    %148 = vector.extract_strided_slice %127 {offsets = [0, 100], sizes = [4, 16], strides = [1, 1]} : vector<4x316xf32> to vector<4x16xf32>
    %c0_123 = arith.constant 0 : index
    %c0_124 = arith.constant 0 : index
    %c80_125 = arith.constant 80 : index
    %149 = vector.load %arg3[%c0_123, %c0_124, %c80_125] : memref<1x4x256xf32, #tpu.memory_space<vmem>>, vector<1x4x16xf32>
    %150 = vector.shape_cast %149 : vector<1x4x16xf32> to vector<4x16xf32>
    %151 = vector.shape_cast %148 : vector<4x16xf32> to vector<1x4x16xf32>
    tpu.vector_store %arg3[%c0_123, %c0_124, %c80_125], %151 {strides = array<i32>} : memref<1x4x256xf32, #tpu.memory_space<vmem>>, vector<1x4x16xf32>,
    %152 = vector.extract_strided_slice %127 {offsets = [0, 120], sizes = [4, 16], strides = [1, 1]} : vector<4x316xf32> to vector<4x16xf32>
    %c0_126 = arith.constant 0 : index
    %c0_127 = arith.constant 0 : index
    %c96_128 = arith.constant 96 : index
    %153 = vector.load %arg3[%c0_126, %c0_127, %c96_128] : memref<1x4x256xf32, #tpu.memory_space<vmem>>, vector<1x4x16xf32>
    %154 = vector.shape_cast %153 : vector<1x4x16xf32> to vector<4x16xf32>
    %155 = vector.shape_cast %152 : vector<4x16xf32> to vector<1x4x16xf32>
    tpu.vector_store %arg3[%c0_126, %c0_127, %c96_128], %155 {strides = array<i32>} : memref<1x4x256xf32, #tpu.memory_space<vmem>>, vector<1x4x16xf32>,
    %156 = vector.extract_strided_slice %127 {offsets = [0, 140], sizes = [4, 16], strides = [1, 1]} : vector<4x316xf32> to vector<4x16xf32>
    %c0_129 = arith.constant 0 : index
    %c0_130 = arith.constant 0 : index
    %c112_131 = arith.constant 112 : index
    %157 = vector.load %arg3[%c0_129, %c0_130, %c112_131] : memref<1x4x256xf32, #tpu.memory_space<vmem>>, vector<1x4x16xf32>
    %158 = vector.shape_cast %157 : vector<1x4x16xf32> to vector<4x16xf32>
    %159 = vector.shape_cast %156 : vector<4x16xf32> to vector<1x4x16xf32>
    tpu.vector_store %arg3[%c0_129, %c0_130, %c112_131], %159 {strides = array<i32>} : memref<1x4x256xf32, #tpu.memory_space<vmem>>, vector<1x4x16xf32>,
    %160 = vector.extract_strided_slice %127 {offsets = [0, 160], sizes = [4, 16], strides = [1, 1]} : vector<4x316xf32> to vector<4x16xf32>
    %c0_132 = arith.constant 0 : index
    %c0_133 = arith.constant 0 : index
    %c128_134 = arith.constant 128 : index
    %161 = vector.load %arg3[%c0_132, %c0_133, %c128_134] : memref<1x4x256xf32, #tpu.memory_space<vmem>>, vector<1x4x16xf32>
    %162 = vector.shape_cast %161 : vector<1x4x16xf32> to vector<4x16xf32>
    %163 = vector.shape_cast %160 : vector<4x16xf32> to vector<1x4x16xf32>
    tpu.vector_store %arg3[%c0_132, %c0_133, %c128_134], %163 {strides = array<i32>} : memref<1x4x256xf32, #tpu.memory_space<vmem>>, vector<1x4x16xf32>,
    %164 = vector.extract_strided_slice %127 {offsets = [0, 180], sizes = [4, 16], strides = [1, 1]} : vector<4x316xf32> to vector<4x16xf32>
    %c0_135 = arith.constant 0 : index
    %c0_136 = arith.constant 0 : index
    %c144_137 = arith.constant 144 : index
    %165 = vector.load %arg3[%c0_135, %c0_136, %c144_137] : memref<1x4x256xf32, #tpu.memory_space<vmem>>, vector<1x4x16xf32>
    %166 = vector.shape_cast %165 : vector<1x4x16xf32> to vector<4x16xf32>
    %167 = vector.shape_cast %164 : vector<4x16xf32> to vector<1x4x16xf32>
    tpu.vector_store %arg3[%c0_135, %c0_136, %c144_137], %167 {strides = array<i32>} : memref<1x4x256xf32, #tpu.memory_space<vmem>>, vector<1x4x16xf32>,
    %168 = vector.extract_strided_slice %127 {offsets = [0, 200], sizes = [4, 16], strides = [1, 1]} : vector<4x316xf32> to vector<4x16xf32>
    %c0_138 = arith.constant 0 : index
    %c0_139 = arith.constant 0 : index
    %c160_140 = arith.constant 160 : index
    %169 = vector.load %arg3[%c0_138, %c0_139, %c160_140] : memref<1x4x256xf32, #tpu.memory_space<vmem>>, vector<1x4x16xf32>
    %170 = vector.shape_cast %169 : vector<1x4x16xf32> to vector<4x16xf32>
    %171 = vector.shape_cast %168 : vector<4x16xf32> to vector<1x4x16xf32>
    tpu.vector_store %arg3[%c0_138, %c0_139, %c160_140], %171 {strides = array<i32>} : memref<1x4x256xf32, #tpu.memory_space<vmem>>, vector<1x4x16xf32>,
    %172 = vector.extract_strided_slice %127 {offsets = [0, 220], sizes = [4, 16], strides = [1, 1]} : vector<4x316xf32> to vector<4x16xf32>
    %c0_141 = arith.constant 0 : index
    %c0_142 = arith.constant 0 : index
    %c176_143 = arith.constant 176 : index
    %173 = vector.load %arg3[%c0_141, %c0_142, %c176_143] : memref<1x4x256xf32, #tpu.memory_space<vmem>>, vector<1x4x16xf32>
    %174 = vector.shape_cast %173 : vector<1x4x16xf32> to vector<4x16xf32>
    %175 = vector.shape_cast %172 : vector<4x16xf32> to vector<1x4x16xf32>
    tpu.vector_store %arg3[%c0_141, %c0_142, %c176_143], %175 {strides = array<i32>} : memref<1x4x256xf32, #tpu.memory_space<vmem>>, vector<1x4x16xf32>,
    %176 = vector.extract_strided_slice %127 {offsets = [0, 240], sizes = [4, 16], strides = [1, 1]} : vector<4x316xf32> to vector<4x16xf32>
    %c0_144 = arith.constant 0 : index
    %c0_145 = arith.constant 0 : index
    %c192_146 = arith.constant 192 : index
    %177 = vector.load %arg3[%c0_144, %c0_145, %c192_146] : memref<1x4x256xf32, #tpu.memory_space<vmem>>, vector<1x4x16xf32>
    %178 = vector.shape_cast %177 : vector<1x4x16xf32> to vector<4x16xf32>
    %179 = vector.shape_cast %176 : vector<4x16xf32> to vector<1x4x16xf32>
    tpu.vector_store %arg3[%c0_144, %c0_145, %c192_146], %179 {strides = array<i32>} : memref<1x4x256xf32, #tpu.memory_space<vmem>>, vector<1x4x16xf32>,
    %180 = vector.extract_strided_slice %127 {offsets = [0, 260], sizes = [4, 16], strides = [1, 1]} : vector<4x316xf32> to vector<4x16xf32>
    %c0_147 = arith.constant 0 : index
    %c0_148 = arith.constant 0 : index
    %c208_149 = arith.constant 208 : index
    %181 = vector.load %arg3[%c0_147, %c0_148, %c208_149] : memref<1x4x256xf32, #tpu.memory_space<vmem>>, vector<1x4x16xf32>
    %182 = vector.shape_cast %181 : vector<1x4x16xf32> to vector<4x16xf32>
    %183 = vector.shape_cast %180 : vector<4x16xf32> to vector<1x4x16xf32>
    tpu.vector_store %arg3[%c0_147, %c0_148, %c208_149], %183 {strides = array<i32>} : memref<1x4x256xf32, #tpu.memory_space<vmem>>, vector<1x4x16xf32>,
    %184 = vector.extract_strided_slice %127 {offsets = [0, 280], sizes = [4, 16], strides = [1, 1]} : vector<4x316xf32> to vector<4x16xf32>
    %c0_150 = arith.constant 0 : index
    %c0_151 = arith.constant 0 : index
    %c224_152 = arith.constant 224 : index
    %185 = vector.load %arg3[%c0_150, %c0_151, %c224_152] : memref<1x4x256xf32, #tpu.memory_space<vmem>>, vector<1x4x16xf32>
    %186 = vector.shape_cast %185 : vector<1x4x16xf32> to vector<4x16xf32>
    %187 = vector.shape_cast %184 : vector<4x16xf32> to vector<1x4x16xf32>
    tpu.vector_store %arg3[%c0_150, %c0_151, %c224_152], %187 {strides = array<i32>} : memref<1x4x256xf32, #tpu.memory_space<vmem>>, vector<1x4x16xf32>,
    %188 = vector.extract_strided_slice %127 {offsets = [0, 300], sizes = [4, 16], strides = [1, 1]} : vector<4x316xf32> to vector<4x16xf32>
    %c0_153 = arith.constant 0 : index
    %c0_154 = arith.constant 0 : index
    %c240_155 = arith.constant 240 : index
    %189 = vector.load %arg3[%c0_153, %c0_154, %c240_155] : memref<1x4x256xf32, #tpu.memory_space<vmem>>, vector<1x4x16xf32>
    %190 = vector.shape_cast %189 : vector<1x4x16xf32> to vector<4x16xf32>
    %191 = vector.shape_cast %188 : vector<4x16xf32> to vector<1x4x16xf32>
    tpu.vector_store %arg3[%c0_153, %c0_154, %c240_155], %191 {strides = array<i32>} : memref<1x4x256xf32, #tpu.memory_space<vmem>>, vector<1x4x16xf32>,
    %c0_156 = arith.constant 0 : index
    %c0_157 = arith.constant 0 : index
    %c0_158 = arith.constant 0 : index
    %192 = vector.load %arg3[%c0_156, %c0_157, %c0_158] : memref<1x4x256xf32, #tpu.memory_space<vmem>>, vector<1x4x256xf32>
    %193 = vector.shape_cast %192 : vector<1x4x256xf32> to vector<4x256xf32>
    %cst_159 = arith.constant dense<0.000000e+00> : vector<4xf32>
    %194 = vector.multi_reduction <add>, %193, %cst_159 [1] : vector<4x256xf32> to vector<4xf32>
    %195 = vector.shape_cast %194 : vector<4xf32> to vector<4x1xf32>
    %c0_160 = arith.constant 0 : index
    %c0_161 = arith.constant 0 : index
    %c0_162 = arith.constant 0 : index
    %196 = vector.load %arg4[%c0_160, %c0_161, %c0_162] : memref<1x4x1xf32, #tpu.memory_space<vmem>>, vector<1x4x1xf32>
    %197 = vector.shape_cast %196 : vector<1x4x1xf32> to vector<4x1xf32>
    %198 = vector.shape_cast %195 : vector<4x1xf32> to vector<1x4x1xf32>
    tpu.vector_store %arg4[%c0_160, %c0_161, %c0_162], %198 {strides = array<i32>} : memref<1x4x1xf32, #tpu.memory_space<vmem>>, vector<1x4x1xf32>,
    %199 = arith.mulf %193, %193 : vector<4x256xf32>
    %cst_163 = arith.constant dense<0.000000e+00> : vector<4xf32>
    %200 = vector.multi_reduction <add>, %199, %cst_163 [1] : vector<4x256xf32> to vector<4xf32>
    %201 = vector.shape_cast %200 : vector<4xf32> to vector<4x1xf32>
    %c0_164 = arith.constant 0 : index
    %c0_165 = arith.constant 0 : index
    %c0_166 = arith.constant 0 : index
    %202 = vector.load %arg5[%c0_164, %c0_165, %c0_166] : memref<1x4x1xf32, #tpu.memory_space<vmem>>, vector<1x4x1xf32>
    %203 = vector.shape_cast %202 : vector<1x4x1xf32> to vector<4x1xf32>
    %204 = vector.shape_cast %201 : vector<4x1xf32> to vector<1x4x1xf32>
    tpu.vector_store %arg5[%c0_164, %c0_165, %c0_166], %204 {strides = array<i32>} : memref<1x4x1xf32, #tpu.memory_space<vmem>>, vector<1x4x1xf32>,
    return
  }
  func.func @transform_0(%arg0: i32) -> (i32, i32, i32) {
    %c0_i32 = arith.constant 0 : i32
    %c0_i32_0 = arith.constant 0 : i32
    %c0_i32_1 = arith.constant 0 : i32
    return %arg0, %c0_i32, %c0_i32_0 : i32, i32, i32
  }
  func.func @transform_1(%arg0: i32) -> (i32, i32) {
    %c0_i32 = arith.constant 0 : i32
    %c0_i32_0 = arith.constant 0 : i32
    %c0_i32_1 = arith.constant 0 : i32
    return %c0_i32, %c0_i32_0 : i32, i32
  }
  func.func @transform_2(%arg0: i32) -> (i32, i32, i32) {
    %c0_i32 = arith.constant 0 : i32
    %c0_i32_0 = arith.constant 0 : i32
    %c0_i32_1 = arith.constant 0 : i32
    return %arg0, %c0_i32, %c0_i32_0 : i32, i32, i32
  }
  func.func @transform_3(%arg0: i32) -> (i32, i32, i32) {
    %c0_i32 = arith.constant 0 : i32
    %c0_i32_0 = arith.constant 0 : i32
    %c0_i32_1 = arith.constant 0 : i32
    return %arg0, %c0_i32, %c0_i32_0 : i32, i32, i32
  }
  func.func @transform_4(%arg0: i32) -> (i32, i32, i32) {
    %c0_i32 = arith.constant 0 : i32
    %c0_i32_0 = arith.constant 0 : i32
    %c0_i32_1 = arith.constant 0 : i32
    return %arg0, %c0_i32, %c0_i32_0 : i32, i32, i32
  }
}

</mosaic_0001>

<llo_original>
// kernel: tpu_custom_call.1
$region0: #{tpu_custom_call.1}
  #allocation0 [shape = 'u32[]', space=smem, size = 0x4, offset = 0x4, fixed_abs, tag = 'smem constant byte address 0x4 - core index']
  #allocation1 [shape = 'u32[144,128]{1,0:T(1,128)}', space=vmem, size = 0x12000, scoped, tag = 'internal scratch']
  #allocation2 [shape = 'f32[4,400]{1,0:T(4,128)}', space=vmem, size = 0x2000, scoped, tag = 'scratch operand']
  %s0 = inlined_call_operand.hbm [shape: f32[2,4,256], index: 0, kind: input, shape index: {}]
  %s1 = inlined_call_operand.hbm [shape: f32[4,9], index: 1, kind: input, shape index: {}]
  %s2 = inlined_call_operand.hbm [shape: f32[2,4,256], index: 2, kind: output, shape index: {0}]
  %s3 = inlined_call_operand.vmem [shape: f32[2,4,1], index: 3, kind: output, shape index: {1}]
  %s4 = inlined_call_operand.vmem [shape: f32[2,4,1], index: 4, kind: output, shape index: {2}]
  %5 = xla_tuple %s2, %s3, %s4
  %s6 = sld [smem:[#allocation0]]
  $region65: #{tpu_custom_call.1} parent=0
    _
  %s8 = ssub.s32 1, %s6
  %s9 = scalar_select 0, %s8, %s6
  $region1: #{tpu_custom_call.1} parent=0
    #allocation3 [shape = 'u8[8192]{0}', space=vmem, size = 0x2000, scoped, tag = 'input window, operand 0']
    #allocation4 [shape = 's32[2]{0}', space=sflag, size = 0x8, scoped, tag = 'scoped memory for tpu_custom_call.1']
    #allocation5 [shape = 's32[2]{0}', space=sflag, size = 0x8, scoped, tag = 'scoped memory for tpu_custom_call.1']
    #allocation6 [shape = 'u8[2048]{0}', space=vmem, size = 0x800, scoped, tag = 'input window, operand 1, single buffered']
    #allocation7 [shape = 's32[1]{0}', space=sflag, size = 0x4, scoped, tag = 'scoped memory for tpu_custom_call.1']
    #allocation8 [shape = 'u8[8192]{0}', space=vmem, size = 0x2000, scoped, tag = 'output window, operand 0']
    %10 = vsyncpa [#allocation4], 0
    %s11 = scalar_lea.sflag [#allocation4], 1
    %12 = vsyncpa %s11, 0
    %13 = vsyncpa [#allocation7], 0
    %14 = vsyncpa [#allocation5], 0
    %s15 = scalar_lea.sflag [#allocation5], 1
    %16 = vsyncpa %s15, 0
    loop: start=0, step=1, limit=4
    $region2: #{tpu_custom_call.1} parent=1 // loop_pre_header
      _
    $region3: #{tpu_custom_call.1} parent=1 // loop_header
      %s18 = sphi 0, %s22
      %p19 = scmp.ge.s32.totalorder %s18, 4
      %s28 = sphi 0, %s30
      %s31 = sphi 0, %s28
      %s32 = sphi 0, %s31
      %s48 = sphi 0, %s32
      %s52 = sphi 0, %s52
      %s54 = sphi 0, %s52
      %s55 = sphi 0, %s54
      %s69 = sphi 0, %s55
      %s75 = sphi 0, %s77
      %s78 = sphi 0, %s75
      %s79 = sphi 0, %s78
      %s95 = sphi 0, %s79
      %s101 = sphi 0, %s103
      %s104 = sphi 0, %s101
      %s105 = sphi 0, %s104
      %s121 = sphi 0, %s105
      %s127 = sphi 0, %s129
      %s130 = sphi 0, %s127
      %s131 = sphi 0, %s130
      %s147 = sphi 0, %s131
    $region4: #{tpu_custom_call.1} parent=1 // loop_header_branch
      %21 = sbr.rel (%p19) target = $region8
    $region5: #{tpu_custom_call.1} parent=1 // loop_body
      %s23 = ssub.s32 %s18, 1
      %s24 = ssub.s32 %s18, 2
      %s25 = sadd.s32 %s18, 1
      %s26 = ssub.s32 %s18, %s25
      %p27 = scmp.eq.s32.totalorder %s26, 0
      %s29 = sadd.s32 %s28, 1
      %s30 = scalar_select %p27, %s28, %s29
      %p33 = pneg %p27
      %p34 = scmp.eq.s32.totalorder %s18, 1
      %p35 = por %p33, %p34
      %p36 = scmp.ne.s32.totalorder %s28, %s31
      %p37 = scmp.eq.s32.totalorder %s18, 0
      %p38 = por %p36, %p37
      %p39 = scmp.ne.s32.totalorder %s28, %s31
      %p40 = scmp.eq.s32.totalorder %s23, 1
      %p41 = por %p39, %p40
      %p42 = scmp.ne.s32.totalorder %s31, %s32
      %p43 = scmp.eq.s32.totalorder %s23, 0
      %p44 = por %p42, %p43
      %p45 = scmp.ne.s32.totalorder %s31, %s32
      %p46 = scmp.eq.s32.totalorder %s24, 1
      %p47 = por %p45, %p46
      %p49 = scmp.ne.s32.totalorder %s32, %s48
      %p50 = scmp.eq.s32.totalorder %s24, 0
      %p51 = por %p49, %p50
      %s53 = sadd.s32 %s52, 1
      %p56 = scmp.eq.s32.totalorder %s18, 1
      %p57 = scmp.ne.s32.totalorder %s52, %s54
      %p58 = scmp.eq.s32.totalorder %s18, 0
      %p59 = por %p57, %p58
      %p60 = scmp.ne.s32.totalorder %s52, %s54
      %p61 = scmp.eq.s32.totalorder %s23, 1
      %p62 = por %p60, %p61
      %p63 = scmp.ne.s32.totalorder %s54, %s55
      %p64 = scmp.eq.s32.totalorder %s23, 0
      %p65 = por %p63, %p64
      %p66 = scmp.ne.s32.totalorder %s54, %s55
      %p67 = scmp.eq.s32.totalorder %s24, 1
      %p68 = por %p66, %p67
      %p70 = scmp.ne.s32.totalorder %s55, %s69
      %p71 = scmp.eq.s32.totalorder %s24, 0
      %p72 = por %p70, %p71
      %s73 = ssub.s32 %s18, %s25
      %p74 = scmp.eq.s32.totalorder %s73, 0
      %s76 = sadd.s32 %s75, 1
      %s77 = scalar_select %p74, %s75, %s76
      %p80 = pneg %p74
      %p81 = scmp.eq.s32.totalorder %s18, 1
      %p82 = por %p80, %p81
      %p83 = scmp.ne.s32.totalorder %s75, %s78
      %p84 = scmp.eq.s32.totalorder %s18, 0
      %p85 = por %p83, %p84
      %p86 = scmp.ne.s32.totalorder %s75, %s78
      %p87 = scmp.eq.s32.totalorder %s23, 1
      %p88 = por %p86, %p87
      %p89 = scmp.ne.s32.totalorder %s78, %s79
      %p90 = scmp.eq.s32.totalorder %s23, 0
      %p91 = por %p89, %p90
      %p92 = scmp.ne.s32.totalorder %s78, %s79
      %p93 = scmp.eq.s32.totalorder %s24, 1
      %p94 = por %p92, %p93
      %p96 = scmp.ne.s32.totalorder %s79, %s95
      %p97 = scmp.eq.s32.totalorder %s24, 0
      %p98 = por %p96, %p97
      %s99 = ssub.s32 %s18, %s25
      %p100 = scmp.eq.s32.totalorder %s99, 0
      %s102 = sadd.s32 %s101, 1
      %s103 = scalar_select %p100, %s101, %s102
      %p106 = pneg %p100
      %p107 = scmp.eq.s32.totalorder %s18, 1
      %p108 = por %p106, %p107
      %p109 = scmp.ne.s32.totalorder %s101, %s104
      %p110 = scmp.eq.s32.totalorder %s18, 0
      %p111 = por %p109, %p110
      %p112 = scmp.ne.s32.totalorder %s101, %s104
      %p113 = scmp.eq.s32.totalorder %s23, 1
      %p114 = por %p112, %p113
      %p115 = scmp.ne.s32.totalorder %s104, %s105
      %p116 = scmp.eq.s32.totalorder %s23, 0
      %p117 = por %p115, %p116
      %p118 = scmp.ne.s32.totalorder %s104, %s105
      %p119 = scmp.eq.s32.totalorder %s24, 1
      %p120 = por %p118, %p119
      %p122 = scmp.ne.s32.totalorder %s105, %s121
      %p123 = scmp.eq.s32.totalorder %s24, 0
      %p124 = por %p122, %p123
      %s125 = ssub.s32 %s18, %s25
      %p126 = scmp.eq.s32.totalorder %s125, 0
      %s128 = sadd.s32 %s127, 1
      %s129 = scalar_select %p126, %s127, %s128
      %p132 = pneg %p126
      %p133 = scmp.eq.s32.totalorder %s18, 1
      %p134 = por %p132, %p133
      %p135 = scmp.ne.s32.totalorder %s127, %s130
      %p136 = scmp.eq.s32.totalorder %s18, 0
      %p137 = por %p135, %p136
      %p138 = scmp.ne.s32.totalorder %s127, %s130
      %p139 = scmp.eq.s32.totalorder %s23, 1
      %p140 = por %p138, %p139
      %p141 = scmp.ne.s32.totalorder %s130, %s131
      %p142 = scmp.eq.s32.totalorder %s23, 0
      %p143 = por %p141, %p142
      %p144 = scmp.ne.s32.totalorder %s130, %s131
      %p145 = scmp.eq.s32.totalorder %s24, 1
      %p146 = por %p144, %p145
      %p148 = scmp.ne.s32.totalorder %s131, %s147
      %p149 = scmp.eq.s32.totalorder %s24, 0
      %p150 = por %p148, %p149
      %p151 = scmp.le.s32.totalorder 1, %s18
      %p152 = scmp.lt.s32.totalorder %s18, 3
      %p153 = pnand %p151, %p152
      %p154 = pneg %p153
      // Predicated region
      $region9: #{tpu_custom_call.1} parent=5 // pred_check
        _
      $region10: #{tpu_custom_call.1} parent=5 // pred_check_branch
        %156 = sbr.rel (%p153) target = $region12
      $region11: #{tpu_custom_call.1} parent=5 // pred_region
        %s157 = ssub.s32 %s18, 1
        // Predicated region
        $region13: #{tpu_custom_call.1} parent=11 // pred_check
          %p158 = pneg %p65
        $region14: #{tpu_custom_call.1} parent=11 // pred_check_branch
          %160 = sbr.rel (%p158) target = $region16
        $region15: #{tpu_custom_call.1} parent=11 // pred_region
          %s162 = ssub.s32 64, 64
          %163 = vsyncadd [#allocation7], %s162
          %s165 = sshll.u32 [#allocation6], 4
          %s166 = int_to_ptr.vmem [resolvable:$true] %s165
          %168 = dma.hbm_to_vmem [thread:$0]  %s1, 64, %s166, [#allocation7]
        $region16: #{tpu_custom_call.1} parent=11 // pred_fallthru
          _
      $region12: #{tpu_custom_call.1} parent=5 // pred_fallthru
        _
      %p169 = scmp.lt.s32.totalorder %s18, 2
      // Predicated region
      $region17: #{tpu_custom_call.1} parent=5 // pred_check
        %p170 = pneg %p169
      $region18: #{tpu_custom_call.1} parent=5 // pred_check_branch
        %172 = sbr.rel (%p170) target = $region20
      $region19: #{tpu_custom_call.1} parent=5 // pred_region
        // Predicated region
        $region21: #{tpu_custom_call.1} parent=19 // pred_check
          %p173 = pneg %p38
        $region22: #{tpu_custom_call.1} parent=19 // pred_check_branch
          %175 = sbr.rel (%p173) target = $region24
        $region23: #{tpu_custom_call.1} parent=19 // pred_region
          %s176 = sand.u32 %s28, 1
          %s177 = scalar_lea.sflag [#allocation4], %s176
          %s178 = sand.u32 %s28, 1
          %s179 = smul.addr %s178, 8
          %s180 = scalar_lea.vmem [#allocation3], %s179
          %s182 = ssub.s32 128, 128
          %183 = vsyncadd %s177, %s182
          %s184 = smul.addr %s18, 2
          %s185 = smul.addr %s184, 64
          %s186 = scalar_lea.hbm %s0, %s185
          %s188 = sshll.u32 %s180, 4
          %s189 = int_to_ptr.vmem [resolvable:$true] %s188
          %191 = dma.hbm_to_vmem [thread:$0]  %s186, 128, %s189, %s177
        $region24: #{tpu_custom_call.1} parent=19 // pred_fallthru
          _
      $region20: #{tpu_custom_call.1} parent=5 // pred_fallthru
        _
      %p192 = scmp.le.s32.totalorder 1, %s18
      %p193 = scmp.lt.s32.totalorder %s18, 3
      %p194 = pnand %p192, %p193
      %p195 = pneg %p194
      // Predicated region
      $region25: #{tpu_custom_call.1} parent=5 // pred_check
        _
      $region26: #{tpu_custom_call.1} parent=5 // pred_check_branch
        %197 = sbr.rel (%p194) target = $region28
      $region27: #{tpu_custom_call.1} parent=5 // pred_region
        %s198 = ssub.s32 %s18, 1
        %s199 = sand.u32 %s31, 1
        %s200 = scalar_lea.sflag [#allocation4], %s199
        %s201 = sand.u32 %s31, 1
        %s202 = smul.addr %s201, 8
        %s203 = scalar_lea.vmem [#allocation3], %s202
        // Predicated region
        $region29: #{tpu_custom_call.1} parent=27 // pred_check
          %p204 = pneg %p44
        $region30: #{tpu_custom_call.1} parent=27 // pred_check_branch
          %206 = sbr.rel (%p204) target = $region32
        $region31: #{tpu_custom_call.1} parent=27 // pred_region
          %207 = dma.done %s200, 128
        $region32: #{tpu_custom_call.1} parent=27 // pred_fallthru
          _
        // Predicated region
        $region33: #{tpu_custom_call.1} parent=27 // pred_check
          %p208 = pneg %p65
        $region34: #{tpu_custom_call.1} parent=27 // pred_check_branch
          %210 = sbr.rel (%p208) target = $region36
        $region35: #{tpu_custom_call.1} parent=27 // pred_region
          %211 = dma.done [#allocation7], 64
        $region36: #{tpu_custom_call.1} parent=27 // pred_fallthru
          _
        %s212 = sand.u32 %s31, 1
        %s213 = scalar_lea.sflag [#allocation4], %s212
        %s214 = sand.u32 %s31, 1
        %s215 = smul.addr %s214, 8
        %s216 = scalar_lea.vmem [#allocation3], %s215
        %p217 = pneg %p44
        %p218 = pneg %p41
        %p219 = pneg %p65
        %p220 = pneg %p62
        %p221 = pneg %p91
        %p222 = pneg %p88
        %s223 = sand.u32 %s78, 1
        %s224 = scalar_lea.sflag [#allocation5], %s223
        %s225 = sand.u32 %s78, 1
        %s226 = smul.addr %s225, 8
        %s227 = scalar_lea.vmem [#allocation8], %s226
        %p228 = pneg %p117
        %p229 = pneg %p114
        %p230 = scmp.lt.s32.totalorder %s23, 1
        %s231 = scalar_select %p230, %s23, 1
        %s232 = smul.addr %s231, 4
        %s233 = scalar_lea.vmem %s3, %s232
        %p234 = pneg %p143
        %p235 = pneg %p140
        %p236 = scmp.lt.s32.totalorder %s23, 1
        %s237 = scalar_select %p236, %s23, 1
        %s238 = smul.addr %s237, 4
        %s239 = scalar_lea.vmem %s4, %s238
        %p240 = scmp.lt.s32.totalorder %s23, 1
        %s241 = scalar_select %p240, %s23, 1
        %s242 = smul.addr %s241, 4
        %s243 = scalar_lea.vmem %s3, %s242
        %p244 = scmp.lt.s32.totalorder %s23, 1
        %s245 = scalar_select %p244, %s23, 1
        %s246 = smul.addr %s245, 4
        %s247 = scalar_lea.vmem %s4, %s246
        %vm248 = vcmask 338944
        %249 = vst.msk [vmem:[#allocation2] sm:$0xf] %vm248, 0.0
        %v250 = vld [vmem:[%s203] sm:$0xf]
        %252 = vrot.lane.b32.xlu0 %v250, 42
        %v253 = vpop.permute.xlu0 %252
        %vm255 = vcmask 470352
        %256 = vst.msk [vmem:[#allocation2] sm:$0xf] %vm255, %v253
        %vm257 = vcmask 503248
        %258 = vst.msk [vmem:[#allocation2] sm:$0xf] %vm257, 0.0
        %v259 = vld [vmem:[%s203] sm:$0xf]
        %261 = vrot.lane.b32.xlu0 %v259, 46
        %v262 = vpop.permute.xlu0 %261
        %vm264 = vcmask 634352
        %265 = vst.msk [vmem:[#allocation2] sm:$0xf] %vm264, %v262
        %vm266 = vcmask 667248
        %267 = vst.msk [vmem:[#allocation2] sm:$0xf] %vm266, 0.0
        %v268 = vld [vmem:[%s203] sm:$0xf]
        %270 = vrot.lane.b32.xlu0 %v268, 50
        %v271 = vpop.permute.xlu0 %270
        %vm273 = vcmask 798352
        %274 = vst.msk [vmem:[#allocation2] sm:$0xf] %vm273, %v271
        %vm275 = vcmask 831248
        %276 = vst.msk [vmem:[#allocation2] sm:$0xf] %vm275, 0.0
        %v277 = vld [vmem:[%s203] sm:$0xf]
        %279 = vrot.lane.b32.xlu0 %v277, 54
        %v280 = vpop.permute.xlu0 %279
        %vm282 = vcmask 962352
        %283 = vst.msk [vmem:[#allocation2] sm:$0xf] %vm282, %v280
        %vm284 = vcmask 995248
        %285 = vst.msk [vmem:[#allocation2] sm:$0xf] %vm284, 0.0
        %v286 = vld [vmem:[%s203] sm:$0xf]
        %288 = vrot.lane.b32.xlu0 %v286, 58
        %v289 = vpop.permute.xlu0 %288
        %v290 = vrot.slane %v289, 4
        %vm291 = vcmask 474112
        %v292 = vsel %vm291, %v290, %v289
        %vm294 = vcmask 1044432
        %vm295 = vcmask 80900
        %vm296 = vmor %vm295, %vm294
        %297 = vst.msk [vmem:[#allocation2] sm:$0xff] %vm296, %v292
        %vm298 = vcmask 109648
        %299 = vst.msk [vmem:[#allocation2 + $0x4] sm:$0xf] %vm298, 0.0
        %v300 = vld [vmem:[%s203] sm:$0xf]
        %302 = vrot.lane.b32.xlu0 %v300, 62
        %v303 = vpop.permute.xlu0 %302
        %vm305 = vcmask 240752
        %306 = vst.msk [vmem:[#allocation2 + $0x4] sm:$0xf] %vm305, %v303
        %vm307 = vcmask 273648
        %308 = vst.msk [vmem:[#allocation2 + $0x4] sm:$0xf] %vm307, 0.0
        %v309 = vld [vmem:[%s203] sm:$0xf]
        %311 = vrot.lane.b32.xlu0 %v309, 66
        %v312 = vpop.permute.xlu0 %311
        %vm314 = vcmask 404752
        %315 = vst.msk [vmem:[#allocation2 + $0x4] sm:$0xf] %vm314, %v312
        %vm316 = vcmask 437648
        %317 = vst.msk [vmem:[#allocation2 + $0x4] sm:$0xf] %vm316, 0.0
        %v318 = vld [vmem:[%s203] sm:$0xf]
        %320 = vrot.lane.b32.xlu0 %v318, 70
        %v321 = vpop.permute.xlu0 %320
        %vm323 = vcmask 568752
        %324 = vst.msk [vmem:[#allocation2 + $0x4] sm:$0xf] %vm323, %v321
        %vm325 = vcmask 601648
        %326 = vst.msk [vmem:[#allocation2 + $0x4] sm:$0xf] %vm325, 0.0
        %v327 = vld [vmem:[%s203 + $0x4] sm:$0xf]
        %329 = vrot.lane.b32.xlu0 %v327, 74
        %v330 = vpop.permute.xlu0 %329
        %vm332 = vcmask 732752
        %333 = vst.msk [vmem:[#allocation2 + $0x4] sm:$0xf] %vm332, %v330
        %vm334 = vcmask 765648
        %335 = vst.msk [vmem:[#allocation2 + $0x4] sm:$0xf] %vm334, 0.0
        %v336 = vld [vmem:[%s203 + $0x4] sm:$0xf]
        %338 = vrot.lane.b32.xlu0 %v336, 78
        %v339 = vpop.permute.xlu0 %338
        %vm341 = vcmask 896752
        %342 = vst.msk [vmem:[#allocation2 + $0x4] sm:$0xf] %vm341, %v339
        %vm343 = vcmask 929648
        %344 = vst.msk [vmem:[#allocation2 + $0x4] sm:$0xf] %vm343, 0.0
        %v345 = vld [vmem:[%s203 + $0x4] sm:$0xf]
        %347 = vrot.lane.b32.xlu0 %v345, 82
        %v348 = vpop.permute.xlu0 %347
        %v349 = vrot.slane %v348, 4
        %vm350 = vcmask 670720
        %v351 = vsel %vm350, %v349, %v348
        %vm353 = vcmask 1044368
        %vm354 = vcmask 15364
        %vm355 = vmor %vm354, %vm353
        %356 = vst.msk [vmem:[#allocation2 + $0x4] sm:$0xff] %vm355, %v351
        %vm357 = vcmask 44048
        %358 = vst.msk [vmem:[#allocation2 + $0x8] sm:$0xf] %vm357, 0.0
        %v359 = vld [vmem:[%s203 + $0x4] sm:$0xf]
        %361 = vrot.lane.b32.xlu0 %v359, 86
        %v362 = vpop.permute.xlu0 %361
        %vm364 = vcmask 175152
        %365 = vst.msk [vmem:[#allocation2 + $0x8] sm:$0xf] %vm364, %v362
        %vm366 = vcmask 208048
        %367 = vst.msk [vmem:[#allocation2 + $0x8] sm:$0xf] %vm366, 0.0
        %v368 = vld [vmem:[%s203 + $0x4] sm:$0xf]
        %370 = vrot.lane.b32.xlu0 %v368, 90
        %v371 = vpop.permute.xlu0 %370
        %vm373 = vcmask 339152
        %374 = vst.msk [vmem:[#allocation2 + $0x8] sm:$0xf] %vm373, %v371
        %vm375 = vcmask 372048
        %376 = vst.msk [vmem:[#allocation2 + $0x8] sm:$0xf] %vm375, 0.0
        %v377 = vld [vmem:[%s203 + $0x4] sm:$0xf]
        %379 = vrot.lane.b32.xlu0 %v377, 94
        %v380 = vpop.permute.xlu0 %379
        %vm382 = vcmask 503152
        %383 = vst.msk [vmem:[#allocation2 + $0x8] sm:$0xf] %vm382, %v380
        %vm384 = vcmask 536048
        %385 = vst.msk [vmem:[#allocation2 + $0x8] sm:$0xf] %vm384, 0.0
        %v386 = vld [vmem:[%s203 + $0x4] sm:$0xf]
        %388 = vrot.lane.b32.xlu0 %v386, 98
        %v389 = vpop.permute.xlu0 %388
        %vm391 = vcmask 667152
        %392 = vst.msk [vmem:[#allocation2 + $0x8] sm:$0xf] %vm391, %v389
        %vm393 = vcmask 700048
        %394 = vst.msk [vmem:[#allocation2 + $0x8] sm:$0xf] %vm393, 0.0
        %v395 = vld [vmem:[%s203 + $0x4] sm:$0xf]
        %397 = vrot.lane.b32.xlu0 %v395, 102
        %v398 = vpop.permute.xlu0 %397
        %vm400 = vcmask 831152
        %401 = vst.msk [vmem:[#allocation2 + $0x8] sm:$0xf] %vm400, %v398
        %vm402 = vcmask 1044272
        %vm403 = vcmask 130052
        %vm404 = vmor %vm403, %vm402
        %405 = vst.msk [vmem:[#allocation2 + $0x8] sm:$0xff] %vm404, 0.0
        %v406 = vld [vmem:[#allocation2] sm:$0xff]
        %v407 = vld [vmem:[#allocation2 + $0x8] sm:$0xf]
        %v408 = vld [vmem:[#allocation6] sm:$0xf]
        %410 = vset.pattern.permute.xlu0 0
        %411 = vperm.xlu0 %410, %v408
        %v412 = vpop.permute.xlu0 %411
        %v415 = vcombine.high %v406, %v406
        %v417 = vmul.f32 %v412, %v406
        %v418 = vmul.f32 %v412, %v415
        %v419 = vmul.f32 %v412, %v407
        %v420 = vadd.f32 %v417, 0.0
        %v421 = vadd.f32 %v418, 0.0
        %v422 = vadd.f32 %v419, 0.0
        %v423 = vld [vmem:[#allocation2] sm:$0xff]
        %v424 = vld [vmem:[#allocation2 + $0x8] sm:$0xf]
        %v425 = vld [vmem:[#allocation6] sm:$0xf]
        %427 = vset.pattern.permute.xlu0 1
        %428 = vperm.xlu0 %427, %v425
        %v429 = vpop.permute.xlu0 %428
        %v433 = vcombine.high %v423, %v423
        %434 = vrot.lane.b32.xlu0 %v423, 126
        %v435 = vpop.permute.xlu0 %434
        %436 = vrot.lane.b32.xlu0 %v433, 126
        %v437 = vpop.permute.xlu0 %436
        %438 = vrot.lane.b32.xlu0 %v424, 126
        %v439 = vpop.permute.xlu0 %438
        %vm440 = vcmask 1031168
        %v441 = vsel %vm440, %v435, %v437
        %v442 = vsel %vm440, %v437, %v439
        %v446 = vmul.f32 %v429, %v441
        %v447 = vmul.f32 %v429, %v442
        %v448 = vmul.f32 %v429, %v439
        %v449 = vadd.f32 %v420, %v446
        %v450 = vadd.f32 %v421, %v447
        %v451 = vadd.f32 %v422, %v448
        %v452 = vld [vmem:[#allocation2] sm:$0xff]
        %v453 = vld [vmem:[#allocation2 + $0x8] sm:$0xf]
        %v454 = vld [vmem:[#allocation6] sm:$0xf]
        %456 = vset.pattern.permute.xlu0 2
        %457 = vperm.xlu0 %456, %v454
        %v458 = vpop.permute.xlu0 %457
        %v462 = vcombine.high %v452, %v452
        %463 = vrot.lane.b32.xlu0 %v452, 124
        %v464 = vpop.permute.xlu0 %463
        %465 = vrot.lane.b32.xlu0 %v462, 124
        %v466 = vpop.permute.xlu0 %465
        %467 = vrot.lane.b32.xlu0 %v453, 124
        %v468 = vpop.permute.xlu0 %467
        %vm469 = vcmask 1014784
        %v470 = vsel %vm469, %v464, %v466
        %v471 = vsel %vm469, %v466, %v468
        %v475 = vmul.f32 %v458, %v470
        %v476 = vmul.f32 %v458, %v471
        %v477 = vmul.f32 %v458, %v468
        %v478 = vadd.f32 %v449, %v475
        %v479 = vadd.f32 %v450, %v476
        %v480 = vadd.f32 %v451, %v477
        %v481 = vld [vmem:[#allocation2] sm:$0xff]
        %v482 = vld [vmem:[#allocation2 + $0x8] sm:$0xf]
        %v483 = vld [vmem:[#allocation6] sm:$0xf]
        %485 = vset.pattern.permute.xlu0 3
        %486 = vperm.xlu0 %485, %v483
        %v487 = vpop.permute.xlu0 %486
        %v491 = vcombine.high %v481, %v481
        %492 = vrot.lane.b32.xlu0 %v481, 88
        %v493 = vpop.permute.xlu0 %492
        %494 = vrot.lane.b32.xlu0 %v491, 88
        %v495 = vpop.permute.xlu0 %494
        %496 = vrot.lane.b32.xlu0 %v482, 88
        %v497 = vpop.permute.xlu0 %496
        %vm498 = vcmask 719872
        %v499 = vsel %vm498, %v493, %v495
        %v500 = vsel %vm498, %v495, %v497
        %v504 = vmul.f32 %v487, %v499
        %v505 = vmul.f32 %v487, %v500
        %v506 = vmul.f32 %v487, %v497
        %v507 = vadd.f32 %v478, %v504
        %v508 = vadd.f32 %v479, %v505
        %v509 = vadd.f32 %v480, %v506
        %v510 = vld [vmem:[#allocation2] sm:$0xff]
        %v511 = vld [vmem:[#allocation2 + $0x8] sm:$0xf]
        %v512 = vld [vmem:[#allocation6] sm:$0xf]
        %514 = vset.pattern.permute.xlu0 4
        %515 = vperm.xlu0 %514, %v512
        %v516 = vpop.permute.xlu0 %515
        %v520 = vcombine.high %v510, %v510
        %521 = vrot.lane.b32.xlu0 %v510, 86
        %v522 = vpop.permute.xlu0 %521
        %523 = vrot.lane.b32.xlu0 %v520, 86
        %v524 = vpop.permute.xlu0 %523
        %525 = vrot.lane.b32.xlu0 %v511, 86
        %v526 = vpop.permute.xlu0 %525
        %vm527 = vcmask 703488
        %v528 = vsel %vm527, %v522, %v524
        %v529 = vsel %vm527, %v524, %v526
        %v533 = vmul.f32 %v516, %v528
        %v534 = vmul.f32 %v516, %v529
        %v535 = vmul.f32 %v516, %v526
        %v536 = vadd.f32 %v507, %v533
        %v537 = vadd.f32 %v508, %v534
        %v538 = vadd.f32 %v509, %v535
        %v539 = vld [vmem:[#allocation2] sm:$0xff]
        %v540 = vld [vmem:[#allocation2 + $0x8] sm:$0xf]
        %v541 = vld [vmem:[#allocation6] sm:$0xf]
        %543 = vset.pattern.permute.xlu0 5
        %544 = vperm.xlu0 %543, %v541
        %v545 = vpop.permute.xlu0 %544
        %v549 = vcombine.high %v539, %v539
        %550 = vrot.lane.b32.xlu0 %v539, 84
        %v551 = vpop.permute.xlu0 %550
        %552 = vrot.lane.b32.xlu0 %v549, 84
        %v553 = vpop.permute.xlu0 %552
        %554 = vrot.lane.b32.xlu0 %v540, 84
        %v555 = vpop.permute.xlu0 %554
        %vm556 = vcmask 687104
        %v557 = vsel %vm556, %v551, %v553
        %v558 = vsel %vm556, %v553, %v555
        %v562 = vmul.f32 %v545, %v557
        %v563 = vmul.f32 %v545, %v558
        %v564 = vmul.f32 %v545, %v555
        %v565 = vadd.f32 %v536, %v562
        %v566 = vadd.f32 %v537, %v563
        %v567 = vadd.f32 %v538, %v564
        %v568 = vld [vmem:[#allocation2] sm:$0xff]
        %v569 = vld [vmem:[#allocation2 + $0x8] sm:$0xff]
        %v570 = vld [vmem:[#allocation6] sm:$0xf]
        %572 = vset.pattern.permute.xlu0 6
        %573 = vperm.xlu0 %572, %v570
        %v574 = vpop.permute.xlu0 %573
        %v578 = vcombine.high %v568, %v568
        %v579 = vcombine.high %v569, %v569
        %580 = vrot.lane.b32.xlu0 %v568, 48
        %v581 = vpop.permute.xlu0 %580
        %582 = vrot.lane.b32.xlu0 %v578, 48
        %v583 = vpop.permute.xlu0 %582
        %584 = vrot.lane.b32.xlu0 %v569, 48
        %v585 = vpop.permute.xlu0 %584
        %586 = vrot.lane.b32.xlu0 %v579, 48
        %v587 = vpop.permute.xlu0 %586
        %vm588 = vcmask 392192
        %v589 = vsel %vm588, %v581, %v583
        %v590 = vsel %vm588, %v583, %v585
        %v591 = vsel %vm588, %v585, %v587
        %v595 = vmul.f32 %v574, %v589
        %v596 = vmul.f32 %v574, %v590
        %v597 = vmul.f32 %v574, %v591
        %v598 = vadd.f32 %v565, %v595
        %v599 = vadd.f32 %v566, %v596
        %v600 = vadd.f32 %v567, %v597
        %v601 = vld [vmem:[#allocation2] sm:$0xff]
        %v602 = vld [vmem:[#allocation2 + $0x8] sm:$0xff]
        %v603 = vld [vmem:[#allocation6] sm:$0xf]
        %605 = vset.pattern.permute.xlu0 7
        %606 = vperm.xlu0 %605, %v603
        %v607 = vpop.permute.xlu0 %606
        %v611 = vcombine.high %v601, %v601
        %v612 = vcombine.high %v602, %v602
        %613 = vrot.lane.b32.xlu0 %v601, 46
        %v614 = vpop.permute.xlu0 %613
        %615 = vrot.lane.b32.xlu0 %v611, 46
        %v616 = vpop.permute.xlu0 %615
        %617 = vrot.lane.b32.xlu0 %v602, 46
        %v618 = vpop.permute.xlu0 %617
        %619 = vrot.lane.b32.xlu0 %v612, 46
        %v620 = vpop.permute.xlu0 %619
        %vm621 = vcmask 375808
        %v622 = vsel %vm621, %v614, %v616
        %v623 = vsel %vm621, %v616, %v618
        %v624 = vsel %vm621, %v618, %v620
        %v628 = vmul.f32 %v607, %v622
        %v629 = vmul.f32 %v607, %v623
        %v630 = vmul.f32 %v607, %v624
        %v631 = vadd.f32 %v598, %v628
        %v632 = vadd.f32 %v599, %v629
        %v633 = vadd.f32 %v600, %v630
        %v634 = vld [vmem:[#allocation2] sm:$0xff]
        %v635 = vld [vmem:[#allocation2 + $0x8] sm:$0xff]
        %v636 = vld [vmem:[#allocation6] sm:$0xf]
        %638 = vset.pattern.permute.xlu0 8
        %639 = vperm.xlu0 %638, %v636
        %v640 = vpop.permute.xlu0 %639
        %v644 = vcombine.high %v634, %v634
        %v645 = vcombine.high %v635, %v635
        %646 = vrot.lane.b32.xlu0 %v634, 44
        %v647 = vpop.permute.xlu0 %646
        %648 = vrot.lane.b32.xlu0 %v644, 44
        %v649 = vpop.permute.xlu0 %648
        %650 = vrot.lane.b32.xlu0 %v635, 44
        %v651 = vpop.permute.xlu0 %650
        %652 = vrot.lane.b32.xlu0 %v645, 44
        %v653 = vpop.permute.xlu0 %652
        %vm654 = vcmask 359424
        %v655 = vsel %vm654, %v647, %v649
        %v656 = vsel %vm654, %v649, %v651
        %v657 = vsel %vm654, %v651, %v653
        %v661 = vmul.f32 %v640, %v655
        %v662 = vmul.f32 %v640, %v656
        %v663 = vmul.f32 %v640, %v657
        %v664 = vadd.f32 %v631, %v661
        %v665 = vadd.f32 %v632, %v662
        %v666 = vadd.f32 %v633, %v663
        %vm667 = vcmask 125952
        %668 = vst.msk [vmem:[%s227] sm:$0xf] %vm667, %v664
        %670 = vrot.lane.b32.xlu0 %v664, 124
        %v671 = vpop.permute.xlu0 %670
        %vm673 = vcmask 257152
        %674 = vst.msk [vmem:[%s227] sm:$0xf] %vm673, %v671
        %675 = vrot.lane.b32.xlu0 %v664, 120
        %v676 = vpop.permute.xlu0 %675
        %vm678 = vcmask 388352
        %679 = vst.msk [vmem:[%s227] sm:$0xf] %vm678, %v676
        %680 = vrot.lane.b32.xlu0 %v664, 116
        %v681 = vpop.permute.xlu0 %680
        %vm683 = vcmask 519552
        %684 = vst.msk [vmem:[%s227] sm:$0xf] %vm683, %v681
        %685 = vrot.lane.b32.xlu0 %v664, 112
        %v686 = vpop.permute.xlu0 %685
        %vm688 = vcmask 650752
        %689 = vst.msk [vmem:[%s227] sm:$0xf] %vm688, %v686
        %690 = vrot.lane.b32.xlu0 %v664, 108
        %v691 = vpop.permute.xlu0 %690
        %vm693 = vcmask 781952
        %694 = vst.msk [vmem:[%s227] sm:$0xf] %vm693, %v691
        %v696 = vcombine.low %v664, %v665
        %697 = vrot.lane.b32.xlu0 %v696, 104
        %v698 = vpop.permute.xlu0 %697
        %v699 = vrot.slane %v698, 4
        %vm700 = vcmask 850944
        %v701 = vsel %vm700, %v698, %v699
        %vm703 = vcmask 913152
        %704 = vst.msk [vmem:[%s227] sm:$0xf] %vm703, %v701
        %705 = vrot.lane.b32.xlu0 %v665, 100
        %v706 = vpop.permute.xlu0 %705
        %vm708 = vcmask 1044352
        %709 = vst.msk [vmem:[%s227] sm:$0xf] %vm708, %v706
        %710 = vrot.lane.b32.xlu0 %v665, 96
        %v711 = vpop.permute.xlu0 %710
        %713 = vst.msk [vmem:[%s227 + $0x4] sm:$0xf] %vm667, %v711
        %714 = vrot.lane.b32.xlu0 %v665, 92
        %v715 = vpop.permute.xlu0 %714
        %717 = vst.msk [vmem:[%s227 + $0x4] sm:$0xf] %vm673, %v715
        %718 = vrot.lane.b32.xlu0 %v665, 88
        %v719 = vpop.permute.xlu0 %718
        %721 = vst.msk [vmem:[%s227 + $0x4] sm:$0xf] %vm678, %v719
        %722 = vrot.lane.b32.xlu0 %v665, 84
        %v723 = vpop.permute.xlu0 %722
        %725 = vst.msk [vmem:[%s227 + $0x4] sm:$0xf] %vm683, %v723
        %726 = vrot.lane.b32.xlu0 %v665, 80
        %v727 = vpop.permute.xlu0 %726
        %729 = vst.msk [vmem:[%s227 + $0x4] sm:$0xf] %vm688, %v727
        %731 = vrot.lane.b32.xlu0 %v666, 76
        %v732 = vpop.permute.xlu0 %731
        %734 = vst.msk [vmem:[%s227 + $0x4] sm:$0xf] %vm693, %v732
        %735 = vrot.lane.b32.xlu0 %v666, 72
        %v736 = vpop.permute.xlu0 %735
        %738 = vst.msk [vmem:[%s227 + $0x4] sm:$0xf] %vm703, %v736
        %739 = vrot.lane.b32.xlu0 %v666, 68
        %v740 = vpop.permute.xlu0 %739
        %742 = vst.msk [vmem:[%s227 + $0x4] sm:$0xf] %vm708, %v740
        %v743 = vld [vmem:[%s227] sm:$0xff]
        %v745 = vcombine.high %v743, %v743
        %vm747 = vcmask 1043456
        %v748 = vsel %vm747, %v743, 0.0
        %v749 = vsel %vm747, %v745, 0.0
        %v750 = vadd.f32 %v748, %v749
        %751 = vadd.xlane.f32.xlu0 %v750
        %v752 = vpop.xlane.xlu0 %751
        %vm753 = vcmask 3072
        %754 = vst.msk [vmem:[%s243] sm:$0xf] %vm753, %v752
        %v755 = vmul.f32 %v743, %v743
        %v757 = vcombine.high %v755, %v755
        %v759 = vsel %vm747, %v755, 0.0
        %v760 = vsel %vm747, %v757, 0.0
        %v761 = vadd.f32 %v759, %v760
        %762 = vadd.xlane.f32.xlu0 %v761
        %v763 = vpop.xlane.xlu0 %762
        %764 = vst.msk [vmem:[%s247] sm:$0xf] %vm753, %v763
        %s765 = sand.u32 %s78, 1
        %s766 = scalar_lea.sflag [#allocation5], %s765
        %s767 = sand.u32 %s78, 1
        %s768 = smul.addr %s767, 8
        %s769 = scalar_lea.vmem [#allocation8], %s768
        %p770 = scmp.lt.s32.totalorder %s23, 1
        %s771 = scalar_select %p770, %s23, 1
        %s772 = smul.addr %s771, 4
        %s773 = scalar_lea.vmem %s3, %s772
        %p774 = scmp.lt.s32.totalorder %s23, 1
        %s775 = scalar_select %p774, %s23, 1
        %s776 = smul.addr %s775, 4
        %s777 = scalar_lea.vmem %s4, %s776
        // Predicated region
        $region37: #{tpu_custom_call.1} parent=27 // pred_check
          %p778 = pneg %p88
        $region38: #{tpu_custom_call.1} parent=27 // pred_check_branch
          %780 = sbr.rel (%p778) target = $region40
        $region39: #{tpu_custom_call.1} parent=27 // pred_region
          %s782 = ssub.s32 128, 128
          %783 = vsyncadd %s766, %s782
          %s784 = smul.addr %s23, 2
          %s785 = smul.addr %s784, 64
          %s786 = scalar_lea.hbm %s2, %s785
          %s788 = sshll.u32 %s769, 4
          %s789 = int_to_ptr.vmem [resolvable:$true] %s788
          %791 = dma.vmem_to_hbm [thread:$0]  %s789, 128, %s786, %s766
        $region40: #{tpu_custom_call.1} parent=27 // pred_fallthru
          _
        // Predicated region
        $region41: #{tpu_custom_call.1} parent=27 // pred_check
          %p792 = pneg %p114
        $region42: #{tpu_custom_call.1} parent=27 // pred_check_branch
          %794 = sbr.rel (%p792) target = $region44
        $region43: #{tpu_custom_call.1} parent=27 // pred_region
          _
        $region44: #{tpu_custom_call.1} parent=27 // pred_fallthru
          _
        // Predicated region
        $region45: #{tpu_custom_call.1} parent=27 // pred_check
          %p795 = pneg %p140
        $region46: #{tpu_custom_call.1} parent=27 // pred_check_branch
          %797 = sbr.rel (%p795) target = $region48
        $region47: #{tpu_custom_call.1} parent=27 // pred_region
          _
        $region48: #{tpu_custom_call.1} parent=27 // pred_fallthru
          _
      $region28: #{tpu_custom_call.1} parent=5 // pred_fallthru
        _
      %p798 = scmp.le.s32.totalorder 2, %s18
      // Predicated region
      $region49: #{tpu_custom_call.1} parent=5 // pred_check
        %p799 = pneg %p798
      $region50: #{tpu_custom_call.1} parent=5 // pred_check_branch
        %801 = sbr.rel (%p799) target = $region52
      $region51: #{tpu_custom_call.1} parent=5 // pred_region
        %s802 = ssub.s32 %s18, 2
        // Predicated region
        $region53: #{tpu_custom_call.1} parent=51 // pred_check
          %p803 = pneg %p94
        $region54: #{tpu_custom_call.1} parent=51 // pred_check_branch
          %805 = sbr.rel (%p803) target = $region56
        $region55: #{tpu_custom_call.1} parent=51 // pred_region
          %s806 = sand.u32 %s79, 1
          %s807 = scalar_lea.sflag [#allocation5], %s806
          %s808 = sand.u32 %s79, 1
          %s809 = smul.addr %s808, 8
          %s810 = scalar_lea.vmem [#allocation8], %s809
          %811 = dma.done %s807, 128
        $region56: #{tpu_custom_call.1} parent=51 // pred_fallthru
          _
        // Predicated region
        $region57: #{tpu_custom_call.1} parent=51 // pred_check
          %p812 = pneg %p120
        $region58: #{tpu_custom_call.1} parent=51 // pred_check_branch
          %814 = sbr.rel (%p812) target = $region60
        $region59: #{tpu_custom_call.1} parent=51 // pred_region
          %p815 = scmp.lt.s32.totalorder %s24, 1
          %s816 = scalar_select %p815, %s24, 1
          %s817 = smul.addr %s816, 4
          %s818 = scalar_lea.vmem %s3, %s817
        $region60: #{tpu_custom_call.1} parent=51 // pred_fallthru
          _
        // Predicated region
        $region61: #{tpu_custom_call.1} parent=51 // pred_check
          %p819 = pneg %p146
        $region62: #{tpu_custom_call.1} parent=51 // pred_check_branch
          %821 = sbr.rel (%p819) target = $region64
        $region63: #{tpu_custom_call.1} parent=51 // pred_region
          %p822 = scmp.lt.s32.totalorder %s24, 1
          %s823 = scalar_select %p822, %s24, 1
          %s824 = smul.addr %s823, 4
          %s825 = scalar_lea.vmem %s4, %s824
        $region64: #{tpu_custom_call.1} parent=51 // pred_fallthru
          _
      $region52: #{tpu_custom_call.1} parent=5 // pred_fallthru
        _
    $region6: #{tpu_custom_call.1} parent=1 // loop_footer
      %s22 = sadd.s32 1, %s18
    $region7: #{tpu_custom_call.1} parent=1 // loop_footer_branch
      %17 = sbr.rel target = $region3
    $region8: #{tpu_custom_call.1} parent=1 // loop_exit
      _
    %826 = vsyncpa [#allocation4], 1
    %s827 = scalar_lea.sflag [#allocation4], 1
    %828 = vsyncpa %s827, 1
    %829 = vsyncpa [#allocation7], 1
    %830 = vsyncpa [#allocation5], 1
    %s831 = scalar_lea.sflag [#allocation5], 1
    %832 = vsyncpa %s831, 1

</llo_original>
